<compile_context>
chip_gen: v5e
topology: v5e:2x2
jax: 0.10.0
libtpu: 0.0.40
codegen_flags: <defaults>
</compile_context>

<pallas_src>
import numpy as np

import jax
import jax.numpy as jnp
from jax.experimental import pallas as pl
from jax.experimental.pallas import tpu as pltpu

VMEM_SPEC = pl.BlockSpec(memory_space=pltpu.MemorySpace.VMEM)


# ---------------------------------------------------------------------------
# Single fused head kernel.
# ---------------------------------------------------------------------------
def _fused_kernel(a10_ref, a20_ref, p1_ref, psel_ref,
                  r1w_ref, r1b_ref,
                  c1w_ref, c1b_ref,
                  c2w_ref, c2b_ref,
                  cw1a_ref, cw1b_ref, cw1c_ref,
                  cw2a_ref, cw2b_ref, cw2c_ref,
                  saw_ref, sab_ref,
                  lw1a_ref, lw1b_ref, lw1c_ref, lb1_ref,
                  lw2_ref, lb2_ref,
                  fca_ref, fcb_ref, fcc_ref, fcl_ref, fcbias_ref,
                  o_ref):
    def mm(a, b):
        return jnp.dot(a, b, preferred_element_type=jnp.float32)

    # --- convReduction1: 4x4 conv on a 4x4 map == matmul; BN folded, ReLU.
    x10 = jnp.maximum(mm(a10_ref[...], r1w_ref[...]) + r1b_ref[...], 0.0)   # (B, c10)
    x20 = a20_ref[...]                                                      # (B, c20)

    # --- convReduction_B60, entirely VMEM-resident.
    # conv1 (2x2 / stride 2) as im2col matmul; BN folded, ReLU.
    y1 = jnp.maximum(mm(p1_ref[...], c1w_ref[...]) + c1b_ref[...], 0.0)     # (B*16, 128)
    # conv2 (2x2 / stride 2) + AdaptiveAvgPool2d((1,1)), decomposed per kernel
    # tap: pooled = sum_t (psel[t] @ y1) @ W2[t]; psel carries the 1/4 factor.
    pooled = mm(mm(psel_ref[0], y1), c2w_ref[0])
    for t in range(1, 4):
        pooled = pooled + mm(mm(psel_ref[t], y1), c2w_ref[t])
    # post-pool BN folded into c2w/c2b; ReLU afterwards (matches torch order).
    x60 = jnp.maximum(pooled + c2b_ref[...], 0.0)                           # (B, 128)

    # --- CBAM channel attention.  Spatial map is 1x1 so maxpool == avgpool == x,
    # hence the factor 2 on the shared-MLP output.  Computed per segment to
    # avoid a 192-lane concatenate/relayout.
    h = jnp.maximum(mm(x10, cw1a_ref[...]) + mm(x20, cw1b_ref[...])
                    + mm(x60, cw1c_ref[...]), 0.0)                          # (B, C/16)
    o10 = x10 * jax.nn.sigmoid(2.0 * mm(h, cw2a_ref[...]))
    o20 = x20 * jax.nn.sigmoid(2.0 * mm(h, cw2b_ref[...]))
    o60 = x60 * jax.nn.sigmoid(2.0 * mm(h, cw2c_ref[...]))

    # --- CBAM spatial attention specialized to the 1x1 map: only the center tap
    # of the 7x7 (pad 3) conv contributes; cat order = [max, mean].
    mx = jnp.maximum(jnp.maximum(jnp.max(o10, axis=-1, keepdims=True),
                                 jnp.max(o20, axis=-1, keepdims=True)),
                     jnp.max(o60, axis=-1, keepdims=True))                  # (B, 1)
    c_total = x10.shape[-1] + x20.shape[-1] + x60.shape[-1]
    mn = (jnp.sum(o10, axis=-1, keepdims=True)
          + jnp.sum(o20, axis=-1, keepdims=True)
          + jnp.sum(o60, axis=-1, keepdims=True)) * (1.0 / float(c_total))  # (B, 1)
    sw = saw_ref[...]                                                       # (1, 2)
    sa = jax.nn.sigmoid(mx * sw[:, 0:1] + mn * sw[:, 1:2] + sab_ref[...])
    # CBAM residual; x_pool == (avg pool over 1x1 + squeeze) == these segments.
    o10 = o10 * sa + x10
    o20 = o20 * sa + x20
    o60 = o60 * sa + x60

    # --- lbl_layers: BatchNorm1d folded into Linear1; the constant
    # lbl_corr_vec branch is folded into lb1 (done in the wrapper).
    lc1 = (mm(o10, lw1a_ref[...]) + mm(o20, lw1b_ref[...])
           + mm(o60, lw1c_ref[...]) + lb1_ref[...])                         # (B, 64)
    lc2 = jnp.maximum(mm(lc1, lw2_ref[...]) + lb2_ref[...], 0.0)            # (B, 128)

    # --- dropout(p=0.2) == identity at inference; final fc on the implicit
    # concat([x_pool, lc2]) as split matmuls.  Weights/bias are zero-padded to
    # 128 output lanes -> unmasked, lane-dense store.
    o_ref[...] = (mm(o10, fca_ref[...]) + mm(o20, fcb_ref[...])
                  + mm(o60, fcc_ref[...]) + mm(lc2, fcl_ref[...])
                  + fcbias_ref[...])


# ---------------------------------------------------------------------------
# Parameter setup (deterministic; BN folded for inference; kernel-ready layout).
# Comments document the mapping from the torch parameter layout.
# ---------------------------------------------------------------------------
def init_params(key, *, c10=32, c20=32, n_classes=19, eps=1e-5):
    c_total = c10 + c20 + 128
    red = c_total // 16
    n_pad = 128                       # lane-dense logits width
    ks = iter(jax.random.split(key, 48))

    def nrm(shape, scale=0.1):
        return scale * jax.random.normal(next(ks), shape, dtype=jnp.float32)

    def bn(n):
        gamma = 1.0 + nrm((n,))
        beta = nrm((n,))
        mean = nrm((n,))
        var = jax.random.uniform(next(ks), (n,), jnp.float32, 0.5, 1.5)
        s = gamma / jnp.sqrt(var + eps)
        t = beta - mean * s
        return s, t

    p = {}

    # convReduction1: Conv2d(c10, c10, 4x4, s2) + BN2d + ReLU, as matmul (BN
    # scale folded into the weight columns).
    w = nrm((c10, c10, 4, 4)); b = nrm((c10,))
    s, t = bn(c10)
    p["r1_w"] = w.reshape(c10, c10 * 16).T * s[None, :]            # (c10*16, c10)
    p["r1_b"] = (b * s + t).reshape(1, c10)

    # convReduction_B60 conv1: Conv2d(2, 128, 2x2, s2) + BN2d + ReLU.
    w = nrm((128, 2, 2, 2)); b = nrm((128,))
    s, t = bn(128)
    p["b60c1_w"] = w.reshape(128, 8).T * s[None, :]                # (8, 128)
    p["b60c1_b"] = (b * s + t).reshape(1, 128)

    # convReduction_B60 conv2: Conv2d(128, 128, 2x2, s2); the avg pool is linear
    # so the post-pool BN2d folds into the conv (ReLU applied in-kernel).
    # Tap-major layout: w2[t=kh*2+kw][c_in, c_out] = torch_w[c_out, c_in, kh, kw].
    w = nrm((128, 128, 2, 2)); b = nrm((128,))
    s, t = bn(128)
    p["b60c2_w"] = w.transpose(2, 3, 1, 0).reshape(4, 128, 128) * s[None, None, :]
    p["b60c2_b"] = (b * s + t).reshape(1, 128)

    # CBAM channel-attention shared MLP (1x1 convs, no bias), split by the
    # concat segments [b10 | b20 | b60] to avoid an in-kernel concatenate.
    w1 = nrm((red, c_total, 1, 1)).reshape(red, c_total).T          # (C, C/16)
    p["cbam_w1_10"] = w1[:c10]
    p["cbam_w1_20"] = w1[c10:c10 + c20]
    p["cbam_w1_60"] = w1[c10 + c20:]
    w2 = nrm((c_total, red, 1, 1)).reshape(c_total, red).T          # (C/16, C)
    p["cbam_w2_10"] = w2[:, :c10]
    p["cbam_w2_20"] = w2[:, c10:c10 + c20]
    p["cbam_w2_60"] = w2[:, c10 + c20:]
    # CBAM spatial 7x7 conv: only the center tap matters on a 1x1 map.
    sa_w_full = nrm((1, 2, 7, 7)); sa_b = nrm((1,))
    p["sa_w"] = sa_w_full[0, :, 3, 3].reshape(1, 2)
    p["sa_b"] = sa_b.reshape(1, 1)

    # label-correlation buffer (19*19) and lbl_layers (BN1d folded into Linear1).
    p["lbl_corr"] = nrm((1, 19 * 19))
    d_in = 19 * 19 + c_total
    s1d, t1d = bn(d_in)
    w1 = nrm((d_in, 64)); b1 = nrm((64,))
    w1f = s1d[:, None] * w1                                         # BN fold
    p["lbl_w1_10"] = w1f[:c10]
    p["lbl_w1_20"] = w1f[c10:c10 + c20]
    p["lbl_w1_60"] = w1f[c10 + c20:c_total]
    p["lbl_w1_l"] = w1f[c_total:]                                   # rows x lbl_corr_vec
    p["lbl_b1"] = (t1d @ w1 + b1).reshape(1, 64)
    p["lbl_w2"] = nrm((64, 128))
    p["lbl_b2"] = nrm((128,)).reshape(1, 128)

    # final fc: Linear(c_total + 128 -> n_classes), split per concat segment and
    # zero-padded to 128 output lanes for an unmasked lane-dense store.
    wf = nrm((c_total + 128, n_classes)); bf = nrm((n_classes,))

    def pad_cols(m):
        return jnp.pad(m, ((0, 0), (0, n_pad - n_classes)))

    p["fc_w_10"] = pad_cols(wf[:c10])
    p["fc_w_20"] = pad_cols(wf[c10:c10 + c20])
    p["fc_w_60"] = pad_cols(wf[c10 + c20:c_total])
    p["fc_w_lc"] = pad_cols(wf[c_total:])
    p["fc_b"] = pad_cols(bf.reshape(1, n_classes))
    return p


# ---------------------------------------------------------------------------
# Forward wrapper: im2col/reshape glue + the single fused pallas_call.
# ---------------------------------------------------------------------------
def _pool_selection(batch):
    """(4, B, B*16) matrices: for conv2 tap t, select+average conv1 outputs."""
    sel = np.zeros((4, batch, batch * 16), dtype=np.float32)
    for b in range(batch):
        for h2 in range(4):
            for w2 in range(4):
                tap = (h2 % 2) * 2 + (w2 % 2)
                sel[tap, b, b * 16 + h2 * 4 + w2] = 0.25
    return sel


def esamble_forward(b10_feat, b20_feat, b60, params, *, n_classes=19):
    batch, c10, h10, w10 = b10_feat.shape
    assert (h10, w10) == (4, 4)            # 4x4 conv stride 2 -> 1x1 spatial map
    assert b20_feat.shape[2:] == (1, 1)    # b0 reduction_6 is 1x1 (so CBAM pools == identity)
    bb, cc, hh, ww = b60.shape
    assert (bb, cc, hh, ww) == (batch, 2, 8, 8)

    # im2col glue (pure reshape/transpose; fused by XLA under jit).
    a10 = b10_feat.reshape(batch, c10 * 16)              # (c,h,w) flatten == torch weight order
    a20 = b20_feat.reshape(batch, -1)
    p1 = (b60.reshape(batch, 2, 4, 2, 4, 2)
             .transpose(0, 2, 4, 1, 3, 5)
             .reshape(batch * 16, 8))                    # rows (b,h2,w2), feats (c,kh,kw)
    psel = jnp.asarray(_pool_selection(batch))           # constant (4, B, B*16)

    # Constant label-correlation branch of lbl_layers' Linear1 folds into its bias
    # (lbl_corr_vec is a registered buffer repeated across the batch).
    b1_eff = params["lbl_corr"] @ params["lbl_w1_l"] + params["lbl_b1"]

    operands = (a10, a20, p1, psel,
                params["r1_w"], params["r1_b"],
                params["b60c1_w"], params["b60c1_b"],
                params["b60c2_w"], params["b60c2_b"],
                params["cbam_w1_10"], params["cbam_w1_20"], params["cbam_w1_60"],
                params["cbam_w2_10"], params["cbam_w2_20"], params["cbam_w2_60"],
                params["sa_w"], params["sa_b"],
                params["lbl_w1_10"], params["lbl_w1_20"], params["lbl_w1_60"], b1_eff,
                params["lbl_w2"], params["lbl_b2"],
                params["fc_w_10"], params["fc_w_20"], params["fc_w_60"],
                params["fc_w_lc"], params["fc_b"])

    c20 = a20.shape[1]
    c_total = c10 + c20 + 128
    red = params["cbam_w1_10"].shape[1]
    n_pad = params["fc_b"].shape[1]
    flops = 2 * (
        batch * (c10 * 16) * c10                                    # convReduction1
        + (batch * 16) * 8 * 128                                    # B60 conv1
        + 4 * (batch * (batch * 16) * 128 + batch * 128 * 128)      # B60 conv2 + avg pool
        + 2 * batch * c_total * red                                 # CBAM channel MLP
        + batch * c_total * 64 + batch * 64 * 128                   # lbl_layers
        + batch * (c_total + 128) * n_pad                           # final fc
    )
    transcendentals = batch * (c_total + 1)                         # channel + spatial sigmoids
    bytes_accessed = sum(int(x.size) * x.dtype.itemsize for x in operands) \
        + batch * n_pad * 4

    out = pl.pallas_call(
        _fused_kernel,
        out_shape=jax.ShapeDtypeStruct((batch, n_pad), jnp.float32),
        in_specs=[VMEM_SPEC] * len(operands),
        out_specs=VMEM_SPEC,
        cost_estimate=pl.CostEstimate(flops=flops,
                                      transcendentals=transcendentals,
                                      bytes_accessed=bytes_accessed),
    )(*operands)

    return out[:, :n_classes]


if __name__ == "__main__":
    key = jax.random.PRNGKey(0)
    kp, k1, k2, k3 = jax.random.split(key, 4)

    BATCH, C10, C20, N_CLASSES = 2, 32, 32, 19
    params = init_params(kp, c10=C10, c20=C20, n_classes=N_CLASSES)

    # Stand-in backbone endpoints (see TODO at top of file), NCHW like PyTorch:
    b10_feat = jax.random.normal(k1, (BATCH, C10, 4, 4), dtype=jnp.float32)  # b5 reduction_6
    b20_feat = jax.random.normal(k2, (BATCH, C20, 1, 1), dtype=jnp.float32)  # b0 reduction_6
    b60 = jax.random.normal(k3, (BATCH, 2, 8, 8), dtype=jnp.float32)         # raw 60m bands

    fwd = jax.jit(esamble_forward, static_argnames=("n_classes",))
    logits = fwd(b10_feat, b20_feat, b60, params, n_classes=N_CLASSES)
    jax.block_until_ready(logits)
    assert logits.shape == (BATCH, N_CLASSES) and logits.dtype == jnp.float32
    print("KERNEL_OK")
</pallas_src>

<mosaic_0001>
module attributes {stable_mosaic.version = 11 : i64} {
  func.func @_fused_kernel(%arg0: memref<2x512xf32, #tpu.memory_space<vmem>>, %arg1: memref<2x32xf32, #tpu.memory_space<vmem>>, %arg2: memref<32x8xf32, #tpu.memory_space<vmem>>, %arg3: memref<4x2x32xf32, #tpu.memory_space<vmem>>, %arg4: memref<512x32xf32, #tpu.memory_space<vmem>>, %arg5: memref<1x32xf32, #tpu.memory_space<vmem>>, %arg6: memref<8x128xf32, #tpu.memory_space<vmem>>, %arg7: memref<1x128xf32, #tpu.memory_space<vmem>>, %arg8: memref<4x128x128xf32, #tpu.memory_space<vmem>>, %arg9: memref<1x128xf32, #tpu.memory_space<vmem>>, %arg10: memref<32x12xf32, #tpu.memory_space<vmem>>, %arg11: memref<32x12xf32, #tpu.memory_space<vmem>>, %arg12: memref<128x12xf32, #tpu.memory_space<vmem>>, %arg13: memref<12x32xf32, #tpu.memory_space<vmem>>, %arg14: memref<12x32xf32, #tpu.memory_space<vmem>>, %arg15: memref<12x128xf32, #tpu.memory_space<vmem>>, %arg16: memref<1x2xf32, #tpu.memory_space<vmem>>, %arg17: memref<1x1xf32, #tpu.memory_space<vmem>>, %arg18: memref<32x64xf32, #tpu.memory_space<vmem>>, %arg19: memref<32x64xf32, #tpu.memory_space<vmem>>, %arg20: memref<128x64xf32, #tpu.memory_space<vmem>>, %arg21: memref<1x64xf32, #tpu.memory_space<vmem>>, %arg22: memref<64x128xf32, #tpu.memory_space<vmem>>, %arg23: memref<1x128xf32, #tpu.memory_space<vmem>>, %arg24: memref<32x128xf32, #tpu.memory_space<vmem>>, %arg25: memref<32x128xf32, #tpu.memory_space<vmem>>, %arg26: memref<128x128xf32, #tpu.memory_space<vmem>>, %arg27: memref<128x128xf32, #tpu.memory_space<vmem>>, %arg28: memref<1x128xf32, #tpu.memory_space<vmem>>, %arg29: memref<2x128xf32, #tpu.memory_space<vmem>>) attributes {dimension_semantics = [], scalar_prefetch = 0 : i64, scratch_operands = 0 : i64, tpu.core_type = #tpu.core_type<tc>} {
    %c0 = arith.constant 0 : index
    %c0_0 = arith.constant 0 : index
    %0 = vector.load %arg0[%c0, %c0_0] : memref<2x512xf32, #tpu.memory_space<vmem>>, vector<2x512xf32>
    %c0_1 = arith.constant 0 : index
    %c0_2 = arith.constant 0 : index
    %1 = vector.load %arg4[%c0_1, %c0_2] : memref<512x32xf32, #tpu.memory_space<vmem>>, vector<512x32xf32>
    %cst = arith.constant dense<0.000000e+00> : vector<2x32xf32>
    %2 = tpu.matmul %0, %1, %cst {dimension_numbers = #tpu.dot_dimension_numbers<[1], [0], [0], [1], [0, 0, 1, 1], [], []>} : vector<2x512xf32>, vector<512x32xf32>, vector<2x32xf32> -> vector<2x32xf32>
    %c0_3 = arith.constant 0 : index
    %c0_4 = arith.constant 0 : index
    %3 = vector.load %arg5[%c0_3, %c0_4] : memref<1x32xf32, #tpu.memory_space<vmem>>, vector<1x32xf32>
    %4 = vector.broadcast %3 : vector<1x32xf32> to vector<2x32xf32>
    %5 = arith.addf %2, %4 : vector<2x32xf32>
    %cst_5 = arith.constant 0.000000e+00 : f32
    %6 = vector.broadcast %cst_5 : f32 to vector<2x32xf32>
    %7 = arith.maximumf %5, %6 : vector<2x32xf32>
    %c0_6 = arith.constant 0 : index
    %c0_7 = arith.constant 0 : index
    %8 = vector.load %arg1[%c0_6, %c0_7] : memref<2x32xf32, #tpu.memory_space<vmem>>, vector<2x32xf32>
    %c0_8 = arith.constant 0 : index
    %c0_9 = arith.constant 0 : index
    %9 = vector.load %arg2[%c0_8, %c0_9] : memref<32x8xf32, #tpu.memory_space<vmem>>, vector<32x8xf32>
    %c0_10 = arith.constant 0 : index
    %c0_11 = arith.constant 0 : index
    %10 = vector.load %arg6[%c0_10, %c0_11] : memref<8x128xf32, #tpu.memory_space<vmem>>, vector<8x128xf32>
    %cst_12 = arith.constant dense<0.000000e+00> : vector<32x128xf32>
    %11 = tpu.matmul %9, %10, %cst_12 {dimension_numbers = #tpu.dot_dimension_numbers<[1], [0], [0], [1], [0, 0, 1, 1], [], []>} : vector<32x8xf32>, vector<8x128xf32>, vector<32x128xf32> -> vector<32x128xf32>
    %c0_13 = arith.constant 0 : index
    %c0_14 = arith.constant 0 : index
    %12 = vector.load %arg7[%c0_13, %c0_14] : memref<1x128xf32, #tpu.memory_space<vmem>>, vector<1x128xf32>
    %13 = vector.broadcast %12 : vector<1x128xf32> to vector<32x128xf32>
    %14 = arith.addf %11, %13 : vector<32x128xf32>
    %cst_15 = arith.constant 0.000000e+00 : f32
    %15 = vector.broadcast %cst_15 : f32 to vector<32x128xf32>
    %16 = arith.maximumf %14, %15 : vector<32x128xf32>
    %c0_16 = arith.constant 0 : index
    %c0_17 = arith.constant 0 : index
    %c0_18 = arith.constant 0 : index
    %17 = vector.load %arg3[%c0_16, %c0_17, %c0_18] : memref<4x2x32xf32, #tpu.memory_space<vmem>>, vector<1x2x32xf32>
    %18 = vector.shape_cast %17 : vector<1x2x32xf32> to vector<2x32xf32>
    %cst_19 = arith.constant dense<0.000000e+00> : vector<2x128xf32>
    %19 = tpu.matmul %18, %16, %cst_19 {dimension_numbers = #tpu.dot_dimension_numbers<[1], [0], [0], [1], [0, 0, 1, 1], [], []>} : vector<2x32xf32>, vector<32x128xf32>, vector<2x128xf32> -> vector<2x128xf32>
    %c0_20 = arith.constant 0 : index
    %c0_21 = arith.constant 0 : index
    %c0_22 = arith.constant 0 : index
    %20 = vector.load %arg8[%c0_20, %c0_21, %c0_22] : memref<4x128x128xf32, #tpu.memory_space<vmem>>, vector<1x128x128xf32>
    %21 = vector.shape_cast %20 : vector<1x128x128xf32> to vector<128x128xf32>
    %cst_23 = arith.constant dense<0.000000e+00> : vector<2x128xf32>
    %22 = tpu.matmul %19, %21, %cst_23 {dimension_numbers = #tpu.dot_dimension_numbers<[1], [0], [0], [1], [0, 0, 1, 1], [], []>} : vector<2x128xf32>, vector<128x128xf32>, vector<2x128xf32> -> vector<2x128xf32>
    %c1 = arith.constant 1 : index
    %c0_24 = arith.constant 0 : index
    %c0_25 = arith.constant 0 : index
    %23 = vector.load %arg3[%c1, %c0_24, %c0_25] : memref<4x2x32xf32, #tpu.memory_space<vmem>>, vector<1x2x32xf32>
    %24 = vector.shape_cast %23 : vector<1x2x32xf32> to vector<2x32xf32>
    %cst_26 = arith.constant dense<0.000000e+00> : vector<2x128xf32>
    %25 = tpu.matmul %24, %16, %cst_26 {dimension_numbers = #tpu.dot_dimension_numbers<[1], [0], [0], [1], [0, 0, 1, 1], [], []>} : vector<2x32xf32>, vector<32x128xf32>, vector<2x128xf32> -> vector<2x128xf32>
    %c1_27 = arith.constant 1 : index
    %c0_28 = arith.constant 0 : index
    %c0_29 = arith.constant 0 : index
    %26 = vector.load %arg8[%c1_27, %c0_28, %c0_29] : memref<4x128x128xf32, #tpu.memory_space<vmem>>, vector<1x128x128xf32>
    %27 = vector.shape_cast %26 : vector<1x128x128xf32> to vector<128x128xf32>
    %cst_30 = arith.constant dense<0.000000e+00> : vector<2x128xf32>
    %28 = tpu.matmul %25, %27, %cst_30 {dimension_numbers = #tpu.dot_dimension_numbers<[1], [0], [0], [1], [0, 0, 1, 1], [], []>} : vector<2x128xf32>, vector<128x128xf32>, vector<2x128xf32> -> vector<2x128xf32>
    %29 = arith.addf %22, %28 : vector<2x128xf32>
    %c2 = arith.constant 2 : index
    %c0_31 = arith.constant 0 : index
    %c0_32 = arith.constant 0 : index
    %30 = vector.load %arg3[%c2, %c0_31, %c0_32] : memref<4x2x32xf32, #tpu.memory_space<vmem>>, vector<1x2x32xf32>
    %31 = vector.shape_cast %30 : vector<1x2x32xf32> to vector<2x32xf32>
    %cst_33 = arith.constant dense<0.000000e+00> : vector<2x128xf32>
    %32 = tpu.matmul %31, %16, %cst_33 {dimension_numbers = #tpu.dot_dimension_numbers<[1], [0], [0], [1], [0, 0, 1, 1], [], []>} : vector<2x32xf32>, vector<32x128xf32>, vector<2x128xf32> -> vector<2x128xf32>
    %c2_34 = arith.constant 2 : index
    %c0_35 = arith.constant 0 : index
    %c0_36 = arith.constant 0 : index
    %33 = vector.load %arg8[%c2_34, %c0_35, %c0_36] : memref<4x128x128xf32, #tpu.memory_space<vmem>>, vector<1x128x128xf32>
    %34 = vector.shape_cast %33 : vector<1x128x128xf32> to vector<128x128xf32>
    %cst_37 = arith.constant dense<0.000000e+00> : vector<2x128xf32>
    %35 = tpu.matmul %32, %34, %cst_37 {dimension_numbers = #tpu.dot_dimension_numbers<[1], [0], [0], [1], [0, 0, 1, 1], [], []>} : vector<2x128xf32>, vector<128x128xf32>, vector<2x128xf32> -> vector<2x128xf32>
    %36 = arith.addf %29, %35 : vector<2x128xf32>
    %c3 = arith.constant 3 : index
    %c0_38 = arith.constant 0 : index
    %c0_39 = arith.constant 0 : index
    %37 = vector.load %arg3[%c3, %c0_38, %c0_39] : memref<4x2x32xf32, #tpu.memory_space<vmem>>, vector<1x2x32xf32>
    %38 = vector.shape_cast %37 : vector<1x2x32xf32> to vector<2x32xf32>
    %cst_40 = arith.constant dense<0.000000e+00> : vector<2x128xf32>
    %39 = tpu.matmul %38, %16, %cst_40 {dimension_numbers = #tpu.dot_dimension_numbers<[1], [0], [0], [1], [0, 0, 1, 1], [], []>} : vector<2x32xf32>, vector<32x128xf32>, vector<2x128xf32> -> vector<2x128xf32>
    %c3_41 = arith.constant 3 : index
    %c0_42 = arith.constant 0 : index
    %c0_43 = arith.constant 0 : index
    %40 = vector.load %arg8[%c3_41, %c0_42, %c0_43] : memref<4x128x128xf32, #tpu.memory_space<vmem>>, vector<1x128x128xf32>
    %41 = vector.shape_cast %40 : vector<1x128x128xf32> to vector<128x128xf32>
    %cst_44 = arith.constant dense<0.000000e+00> : vector<2x128xf32>
    %42 = tpu.matmul %39, %41, %cst_44 {dimension_numbers = #tpu.dot_dimension_numbers<[1], [0], [0], [1], [0, 0, 1, 1], [], []>} : vector<2x128xf32>, vector<128x128xf32>, vector<2x128xf32> -> vector<2x128xf32>
    %43 = arith.addf %36, %42 : vector<2x128xf32>
    %c0_45 = arith.constant 0 : index
    %c0_46 = arith.constant 0 : index
    %44 = vector.load %arg9[%c0_45, %c0_46] : memref<1x128xf32, #tpu.memory_space<vmem>>, vector<1x128xf32>
    %45 = vector.broadcast %44 : vector<1x128xf32> to vector<2x128xf32>
    %46 = arith.addf %43, %45 : vector<2x128xf32>
    %cst_47 = arith.constant 0.000000e+00 : f32
    %47 = vector.broadcast %cst_47 : f32 to vector<2x128xf32>
    %48 = arith.maximumf %46, %47 : vector<2x128xf32>
    %c0_48 = arith.constant 0 : index
    %c0_49 = arith.constant 0 : index
    %49 = vector.load %arg10[%c0_48, %c0_49] : memref<32x12xf32, #tpu.memory_space<vmem>>, vector<32x12xf32>
    %cst_50 = arith.constant dense<0.000000e+00> : vector<2x12xf32>
    %50 = tpu.matmul %7, %49, %cst_50 {dimension_numbers = #tpu.dot_dimension_numbers<[1], [0], [0], [1], [0, 0, 1, 1], [], []>} : vector<2x32xf32>, vector<32x12xf32>, vector<2x12xf32> -> vector<2x12xf32>
    %c0_51 = arith.constant 0 : index
    %c0_52 = arith.constant 0 : index
    %51 = vector.load %arg11[%c0_51, %c0_52] : memref<32x12xf32, #tpu.memory_space<vmem>>, vector<32x12xf32>
    %cst_53 = arith.constant dense<0.000000e+00> : vector<2x12xf32>
    %52 = tpu.matmul %8, %51, %cst_53 {dimension_numbers = #tpu.dot_dimension_numbers<[1], [0], [0], [1], [0, 0, 1, 1], [], []>} : vector<2x32xf32>, vector<32x12xf32>, vector<2x12xf32> -> vector<2x12xf32>
    %53 = arith.addf %50, %52 : vector<2x12xf32>
    %c0_54 = arith.constant 0 : index
    %c0_55 = arith.constant 0 : index
    %54 = vector.load %arg12[%c0_54, %c0_55] : memref<128x12xf32, #tpu.memory_space<vmem>>, vector<128x12xf32>
    %cst_56 = arith.constant dense<0.000000e+00> : vector<2x12xf32>
    %55 = tpu.matmul %48, %54, %cst_56 {dimension_numbers = #tpu.dot_dimension_numbers<[1], [0], [0], [1], [0, 0, 1, 1], [], []>} : vector<2x128xf32>, vector<128x12xf32>, vector<2x12xf32> -> vector<2x12xf32>
    %56 = arith.addf %53, %55 : vector<2x12xf32>
    %cst_57 = arith.constant 0.000000e+00 : f32
    %57 = vector.broadcast %cst_57 : f32 to vector<2x12xf32>
    %58 = arith.maximumf %56, %57 : vector<2x12xf32>
    %c0_58 = arith.constant 0 : index
    %c0_59 = arith.constant 0 : index
    %59 = vector.load %arg13[%c0_58, %c0_59] : memref<12x32xf32, #tpu.memory_space<vmem>>, vector<12x32xf32>
    %cst_60 = arith.constant dense<0.000000e+00> : vector<2x32xf32>
    %60 = tpu.matmul %58, %59, %cst_60 {dimension_numbers = #tpu.dot_dimension_numbers<[1], [0], [0], [1], [0, 0, 1, 1], [], []>} : vector<2x12xf32>, vector<12x32xf32>, vector<2x32xf32> -> vector<2x32xf32>
    %cst_61 = arith.constant 2.000000e+00 : f32
    %61 = vector.broadcast %cst_61 : f32 to vector<2x32xf32>
    %62 = arith.mulf %61, %60 : vector<2x32xf32>
    %63 = arith.negf %62 : vector<2x32xf32>
    %64 = math.exp %63 : vector<2x32xf32>
    %cst_62 = arith.constant 1.000000e+00 : f32
    %65 = vector.broadcast %cst_62 : f32 to vector<2x32xf32>
    %66 = arith.addf %65, %64 : vector<2x32xf32>
    %67 = arith.divf %65, %66 : vector<2x32xf32>
    %68 = arith.mulf %7, %67 : vector<2x32xf32>
    %c0_63 = arith.constant 0 : index
    %c0_64 = arith.constant 0 : index
    %69 = vector.load %arg14[%c0_63, %c0_64] : memref<12x32xf32, #tpu.memory_space<vmem>>, vector<12x32xf32>
    %cst_65 = arith.constant dense<0.000000e+00> : vector<2x32xf32>
    %70 = tpu.matmul %58, %69, %cst_65 {dimension_numbers = #tpu.dot_dimension_numbers<[1], [0], [0], [1], [0, 0, 1, 1], [], []>} : vector<2x12xf32>, vector<12x32xf32>, vector<2x32xf32> -> vector<2x32xf32>
    %cst_66 = arith.constant 2.000000e+00 : f32
    %71 = vector.broadcast %cst_66 : f32 to vector<2x32xf32>
    %72 = arith.mulf %71, %70 : vector<2x32xf32>
    %73 = arith.negf %72 : vector<2x32xf32>
    %74 = math.exp %73 : vector<2x32xf32>
    %cst_67 = arith.constant 1.000000e+00 : f32
    %75 = vector.broadcast %cst_67 : f32 to vector<2x32xf32>
    %76 = arith.addf %75, %74 : vector<2x32xf32>
    %77 = arith.divf %75, %76 : vector<2x32xf32>
    %78 = arith.mulf %8, %77 : vector<2x32xf32>
    %c0_68 = arith.constant 0 : index
    %c0_69 = arith.constant 0 : index
    %79 = vector.load %arg15[%c0_68, %c0_69] : memref<12x128xf32, #tpu.memory_space<vmem>>, vector<12x128xf32>
    %cst_70 = arith.constant dense<0.000000e+00> : vector<2x128xf32>
    %80 = tpu.matmul %58, %79, %cst_70 {dimension_numbers = #tpu.dot_dimension_numbers<[1], [0], [0], [1], [0, 0, 1, 1], [], []>} : vector<2x12xf32>, vector<12x128xf32>, vector<2x128xf32> -> vector<2x128xf32>
    %cst_71 = arith.constant 2.000000e+00 : f32
    %81 = vector.broadcast %cst_71 : f32 to vector<2x128xf32>
    %82 = arith.mulf %81, %80 : vector<2x128xf32>
    %83 = arith.negf %82 : vector<2x128xf32>
    %84 = math.exp %83 : vector<2x128xf32>
    %cst_72 = arith.constant 1.000000e+00 : f32
    %85 = vector.broadcast %cst_72 : f32 to vector<2x128xf32>
    %86 = arith.addf %85, %84 : vector<2x128xf32>
    %87 = arith.divf %85, %86 : vector<2x128xf32>
    %88 = arith.mulf %48, %87 : vector<2x128xf32>
    %cst_73 = arith.constant dense<0xFF800000> : vector<2xf32>
    %89 = vector.multi_reduction <maximumf>, %68, %cst_73 [1] : vector<2x32xf32> to vector<2xf32>
    %90 = vector.shape_cast %89 : vector<2xf32> to vector<2x1xf32>
    %cst_74 = arith.constant dense<0xFF800000> : vector<2xf32>
    %91 = vector.multi_reduction <maximumf>, %78, %cst_74 [1] : vector<2x32xf32> to vector<2xf32>
    %92 = vector.shape_cast %91 : vector<2xf32> to vector<2x1xf32>
    %93 = arith.maximumf %90, %92 : vector<2x1xf32>
    %cst_75 = arith.constant dense<0xFF800000> : vector<2xf32>
    %94 = vector.multi_reduction <maximumf>, %88, %cst_75 [1] : vector<2x128xf32> to vector<2xf32>
    %95 = vector.shape_cast %94 : vector<2xf32> to vector<2x1xf32>
    %96 = arith.maximumf %93, %95 : vector<2x1xf32>
    %cst_76 = arith.constant dense<0.000000e+00> : vector<2xf32>
    %97 = vector.multi_reduction <add>, %68, %cst_76 [1] : vector<2x32xf32> to vector<2xf32>
    %98 = vector.shape_cast %97 : vector<2xf32> to vector<2x1xf32>
    %cst_77 = arith.constant dense<0.000000e+00> : vector<2xf32>
    %99 = vector.multi_reduction <add>, %78, %cst_77 [1] : vector<2x32xf32> to vector<2xf32>
    %100 = vector.shape_cast %99 : vector<2xf32> to vector<2x1xf32>
    %101 = arith.addf %98, %100 : vector<2x1xf32>
    %cst_78 = arith.constant dense<0.000000e+00> : vector<2xf32>
    %102 = vector.multi_reduction <add>, %88, %cst_78 [1] : vector<2x128xf32> to vector<2xf32>
    %103 = vector.shape_cast %102 : vector<2xf32> to vector<2x1xf32>
    %104 = arith.addf %101, %103 : vector<2x1xf32>
    %cst_79 = arith.constant 0.00520833349 : f32
    %105 = vector.broadcast %cst_79 : f32 to vector<2x1xf32>
    %106 = arith.mulf %104, %105 : vector<2x1xf32>
    %c0_80 = arith.constant 0 : index
    %c0_81 = arith.constant 0 : index
    %107 = vector.load %arg16[%c0_80, %c0_81] : memref<1x2xf32, #tpu.memory_space<vmem>>, vector<1x2xf32>
    %108 = vector.extract_strided_slice %107 {offsets = [0, 0], sizes = [1, 1], strides = [1, 1]} : vector<1x2xf32> to vector<1x1xf32>
    %109 = vector.broadcast %108 : vector<1x1xf32> to vector<2x1xf32>
    %110 = arith.mulf %96, %109 : vector<2x1xf32>
    %111 = vector.extract_strided_slice %107 {offsets = [0, 1], sizes = [1, 1], strides = [1, 1]} : vector<1x2xf32> to vector<1x1xf32>
    %112 = vector.broadcast %111 : vector<1x1xf32> to vector<2x1xf32>
    %113 = arith.mulf %106, %112 : vector<2x1xf32>
    %114 = arith.addf %110, %113 : vector<2x1xf32>
    %c0_82 = arith.constant 0 : index
    %c0_83 = arith.constant 0 : index
    %115 = vector.load %arg17[%c0_82, %c0_83] : memref<1x1xf32, #tpu.memory_space<vmem>>, vector<1x1xf32>
    %116 = vector.broadcast %115 : vector<1x1xf32> to vector<2x1xf32>
    %117 = arith.addf %114, %116 : vector<2x1xf32>
    %118 = arith.negf %117 : vector<2x1xf32>
    %119 = math.exp %118 : vector<2x1xf32>
    %cst_84 = arith.constant 1.000000e+00 : f32
    %120 = vector.broadcast %cst_84 : f32 to vector<2x1xf32>
    %121 = arith.addf %120, %119 : vector<2x1xf32>
    %122 = arith.divf %120, %121 : vector<2x1xf32>
    %123 = vector.broadcast %122 : vector<2x1xf32> to vector<2x32xf32>
    %124 = arith.mulf %68, %123 : vector<2x32xf32>
    %125 = arith.addf %124, %7 : vector<2x32xf32>
    %126 = vector.broadcast %122 : vector<2x1xf32> to vector<2x32xf32>
    %127 = arith.mulf %78, %126 : vector<2x32xf32>
    %128 = arith.addf %127, %8 : vector<2x32xf32>
    %129 = vector.broadcast %122 : vector<2x1xf32> to vector<2x128xf32>
    %130 = arith.mulf %88, %129 : vector<2x128xf32>
    %131 = arith.addf %130, %48 : vector<2x128xf32>
    %c0_85 = arith.constant 0 : index
    %c0_86 = arith.constant 0 : index
    %132 = vector.load %arg18[%c0_85, %c0_86] : memref<32x64xf32, #tpu.memory_space<vmem>>, vector<32x64xf32>
    %cst_87 = arith.constant dense<0.000000e+00> : vector<2x64xf32>
    %133 = tpu.matmul %125, %132, %cst_87 {dimension_numbers = #tpu.dot_dimension_numbers<[1], [0], [0], [1], [0, 0, 1, 1], [], []>} : vector<2x32xf32>, vector<32x64xf32>, vector<2x64xf32> -> vector<2x64xf32>
    %c0_88 = arith.constant 0 : index
    %c0_89 = arith.constant 0 : index
    %134 = vector.load %arg19[%c0_88, %c0_89] : memref<32x64xf32, #tpu.memory_space<vmem>>, vector<32x64xf32>
    %cst_90 = arith.constant dense<0.000000e+00> : vector<2x64xf32>
    %135 = tpu.matmul %128, %134, %cst_90 {dimension_numbers = #tpu.dot_dimension_numbers<[1], [0], [0], [1], [0, 0, 1, 1], [], []>} : vector<2x32xf32>, vector<32x64xf32>, vector<2x64xf32> -> vector<2x64xf32>
    %136 = arith.addf %133, %135 : vector<2x64xf32>
    %c0_91 = arith.constant 0 : index
    %c0_92 = arith.constant 0 : index
    %137 = vector.load %arg20[%c0_91, %c0_92] : memref<128x64xf32, #tpu.memory_space<vmem>>, vector<128x64xf32>
    %cst_93 = arith.constant dense<0.000000e+00> : vector<2x64xf32>
    %138 = tpu.matmul %131, %137, %cst_93 {dimension_numbers = #tpu.dot_dimension_numbers<[1], [0], [0], [1], [0, 0, 1, 1], [], []>} : vector<2x128xf32>, vector<128x64xf32>, vector<2x64xf32> -> vector<2x64xf32>
    %139 = arith.addf %136, %138 : vector<2x64xf32>
    %c0_94 = arith.constant 0 : index
    %c0_95 = arith.constant 0 : index
    %140 = vector.load %arg21[%c0_94, %c0_95] : memref<1x64xf32, #tpu.memory_space<vmem>>, vector<1x64xf32>
    %141 = vector.broadcast %140 : vector<1x64xf32> to vector<2x64xf32>
    %142 = arith.addf %139, %141 : vector<2x64xf32>
    %c0_96 = arith.constant 0 : index
    %c0_97 = arith.constant 0 : index
    %143 = vector.load %arg22[%c0_96, %c0_97] : memref<64x128xf32, #tpu.memory_space<vmem>>, vector<64x128xf32>
    %cst_98 = arith.constant dense<0.000000e+00> : vector<2x128xf32>
    %144 = tpu.matmul %142, %143, %cst_98 {dimension_numbers = #tpu.dot_dimension_numbers<[1], [0], [0], [1], [0, 0, 1, 1], [], []>} : vector<2x64xf32>, vector<64x128xf32>, vector<2x128xf32> -> vector<2x128xf32>
    %c0_99 = arith.constant 0 : index
    %c0_100 = arith.constant 0 : index
    %145 = vector.load %arg23[%c0_99, %c0_100] : memref<1x128xf32, #tpu.memory_space<vmem>>, vector<1x128xf32>
    %146 = vector.broadcast %145 : vector<1x128xf32> to vector<2x128xf32>
    %147 = arith.addf %144, %146 : vector<2x128xf32>
    %cst_101 = arith.constant 0.000000e+00 : f32
    %148 = vector.broadcast %cst_101 : f32 to vector<2x128xf32>
    %149 = arith.maximumf %147, %148 : vector<2x128xf32>
    %c0_102 = arith.constant 0 : index
    %c0_103 = arith.constant 0 : index
    %150 = vector.load %arg24[%c0_102, %c0_103] : memref<32x128xf32, #tpu.memory_space<vmem>>, vector<32x128xf32>
    %cst_104 = arith.constant dense<0.000000e+00> : vector<2x128xf32>
    %151 = tpu.matmul %125, %150, %cst_104 {dimension_numbers = #tpu.dot_dimension_numbers<[1], [0], [0], [1], [0, 0, 1, 1], [], []>} : vector<2x32xf32>, vector<32x128xf32>, vector<2x128xf32> -> vector<2x128xf32>
    %c0_105 = arith.constant 0 : index
    %c0_106 = arith.constant 0 : index
    %152 = vector.load %arg25[%c0_105, %c0_106] : memref<32x128xf32, #tpu.memory_space<vmem>>, vector<32x128xf32>
    %cst_107 = arith.constant dense<0.000000e+00> : vector<2x128xf32>
    %153 = tpu.matmul %128, %152, %cst_107 {dimension_numbers = #tpu.dot_dimension_numbers<[1], [0], [0], [1], [0, 0, 1, 1], [], []>} : vector<2x32xf32>, vector<32x128xf32>, vector<2x128xf32> -> vector<2x128xf32>
    %154 = arith.addf %151, %153 : vector<2x128xf32>
    %c0_108 = arith.constant 0 : index
    %c0_109 = arith.constant 0 : index
    %155 = vector.load %arg26[%c0_108, %c0_109] : memref<128x128xf32, #tpu.memory_space<vmem>>, vector<128x128xf32>
    %cst_110 = arith.constant dense<0.000000e+00> : vector<2x128xf32>
    %156 = tpu.matmul %131, %155, %cst_110 {dimension_numbers = #tpu.dot_dimension_numbers<[1], [0], [0], [1], [0, 0, 1, 1], [], []>} : vector<2x128xf32>, vector<128x128xf32>, vector<2x128xf32> -> vector<2x128xf32>
    %157 = arith.addf %154, %156 : vector<2x128xf32>
    %c0_111 = arith.constant 0 : index
    %c0_112 = arith.constant 0 : index
    %158 = vector.load %arg27[%c0_111, %c0_112] : memref<128x128xf32, #tpu.memory_space<vmem>>, vector<128x128xf32>
    %cst_113 = arith.constant dense<0.000000e+00> : vector<2x128xf32>
    %159 = tpu.matmul %149, %158, %cst_113 {dimension_numbers = #tpu.dot_dimension_numbers<[1], [0], [0], [1], [0, 0, 1, 1], [], []>} : vector<2x128xf32>, vector<128x128xf32>, vector<2x128xf32> -> vector<2x128xf32>
    %160 = arith.addf %157, %159 : vector<2x128xf32>
    %c0_114 = arith.constant 0 : index
    %c0_115 = arith.constant 0 : index
    %161 = vector.load %arg28[%c0_114, %c0_115] : memref<1x128xf32, #tpu.memory_space<vmem>>, vector<1x128xf32>
    %162 = vector.broadcast %161 : vector<1x128xf32> to vector<2x128xf32>
    %163 = arith.addf %160, %162 : vector<2x128xf32>
    %c0_116 = arith.constant 0 : index
    %c0_117 = arith.constant 0 : index
    %164 = vector.load %arg29[%c0_116, %c0_117] : memref<2x128xf32, #tpu.memory_space<vmem>>, vector<2x128xf32>
    tpu.vector_store %arg29[%c0_116, %c0_117], %163 {strides = array<i32>} : memref<2x128xf32, #tpu.memory_space<vmem>>, vector<2x128xf32>,
    return
  }
}

</mosaic_0001>

<llo_original>
// kernel: esamble_forward.1
$region0: #{esamble_forward.1}
  #allocation0 [shape = 'u32[]', space=smem, size = 0x4, offset = 0x4, fixed_abs, tag = 'smem constant byte address 0x4 - core index']
  #allocation1 [shape = 'u32[72,128]{1,0:T(1,128)}', space=vmem, size = 0x9000, scoped, tag = 'internal scratch']
  #allocation2 [shape = 'f32[1,1]{1,0:T(1,128)S(1)}', space=vmem, size = 0x200, scoped, tag = 'scoped memory for esamble_forward.1']
  %s0 = inlined_call_operand.smem [shape: u32[30], index: -1, kind: input, shape index: {}]
  %s1 = sld [smem:[%s0]]
  %s2 = scalar_lea.smem %s0, 1
  %s3 = sld [smem:[%s2]]
  %s4 = scalar_lea.smem %s0, 2
  %s5 = sld [smem:[%s4]]
  %s6 = scalar_lea.smem %s0, 3
  %s7 = sld [smem:[%s6]]
  %s8 = scalar_lea.smem %s0, 4
  %s9 = sld [smem:[%s8]]
  %s10 = scalar_lea.smem %s0, 5
  %s11 = sld [smem:[%s10]]
  %s12 = scalar_lea.smem %s0, 6
  %s13 = sld [smem:[%s12]]
  %s14 = scalar_lea.smem %s0, 7
  %s15 = sld [smem:[%s14]]
  %s16 = scalar_lea.smem %s0, 8
  %s17 = sld [smem:[%s16]]
  %s18 = scalar_lea.smem %s0, 9
  %s19 = sld [smem:[%s18]]
  %s20 = scalar_lea.smem %s0, 10
  %s21 = sld [smem:[%s20]]
  %s22 = scalar_lea.smem %s0, 11
  %s23 = sld [smem:[%s22]]
  %s24 = scalar_lea.smem %s0, 12
  %s25 = sld [smem:[%s24]]
  %s26 = scalar_lea.smem %s0, 13
  %s27 = sld [smem:[%s26]]
  %s28 = scalar_lea.smem %s0, 14
  %s29 = sld [smem:[%s28]]
  %s30 = scalar_lea.smem %s0, 15
  %s31 = sld [smem:[%s30]]
  %s32 = scalar_lea.smem %s0, 16
  %s33 = sld [smem:[%s32]]
  %s34 = scalar_lea.smem %s0, 17
  %s35 = sld [smem:[%s34]]
  %s36 = scalar_lea.smem %s0, 18
  %s37 = sld [smem:[%s36]]
  %s38 = scalar_lea.smem %s0, 19
  %s39 = sld [smem:[%s38]]
  %s40 = scalar_lea.smem %s0, 20
  %s41 = sld [smem:[%s40]]
  %s42 = scalar_lea.smem %s0, 21
  %s43 = sld [smem:[%s42]]
  %s44 = scalar_lea.smem %s0, 22
  %s45 = sld [smem:[%s44]]
  %s46 = scalar_lea.smem %s0, 23
  %s47 = sld [smem:[%s46]]
  %s48 = scalar_lea.smem %s0, 24
  %s49 = sld [smem:[%s48]]
  %s50 = scalar_lea.smem %s0, 25
  %s51 = sld [smem:[%s50]]
  %s52 = scalar_lea.smem %s0, 26
  %s53 = sld [smem:[%s52]]
  %s54 = scalar_lea.smem %s0, 27
  %s55 = sld [smem:[%s54]]
  %s56 = scalar_lea.smem %s0, 28
  %s57 = sld [smem:[%s56]]
  %s58 = scalar_lea.smem %s0, 29
  %s59 = sld [smem:[%s58]]
  %s60 = sld [smem:[#allocation0]]
  $region126: #{esamble_forward.1} parent=0
    _
  %s62 = ssub.s32 1, %s60
  %s63 = scalar_select 0, %s62, %s60
  %v64 = vstv %s35
  %65 = vst [vmem:[#allocation2] sm:$0x1] %v64
  $region1: #{esamble_forward.1} parent=0
    #allocation3 [shape = 'u8[1024]{0}', space=vmem, size = 0x400, scoped, tag = 'output window, operand 0, single buffered']
    #allocation4 [shape = 's32[1]{0}', space=sflag, size = 0x4, scoped, tag = 'scoped memory for esamble_forward.1']
    %66 = vsyncpa [#allocation4], 0
    // Predicated region
    $region2: #{esamble_forward.1} parent=1 // pred_check
      _
    $region3: #{esamble_forward.1} parent=1 // pred_check_branch
      %68 = sbr.rel (0) target = $region5
    $region4: #{esamble_forward.1} parent=1 // pred_region
      _
    $region5: #{esamble_forward.1} parent=1 // pred_fallthru
      _
    // Predicated region
    $region6: #{esamble_forward.1} parent=1 // pred_check
      _
    $region7: #{esamble_forward.1} parent=1 // pred_check_branch
      %70 = sbr.rel (0) target = $region9
    $region8: #{esamble_forward.1} parent=1 // pred_region
      _
    $region9: #{esamble_forward.1} parent=1 // pred_fallthru
      _
    // Predicated region
    $region10: #{esamble_forward.1} parent=1 // pred_check
      _
    $region11: #{esamble_forward.1} parent=1 // pred_check_branch
      %72 = sbr.rel (0) target = $region13
    $region12: #{esamble_forward.1} parent=1 // pred_region
      _
    $region13: #{esamble_forward.1} parent=1 // pred_fallthru
      _
    // Predicated region
    $region14: #{esamble_forward.1} parent=1 // pred_check
      _
    $region15: #{esamble_forward.1} parent=1 // pred_check_branch
      %74 = sbr.rel (0) target = $region17
    $region16: #{esamble_forward.1} parent=1 // pred_region
      _
    $region17: #{esamble_forward.1} parent=1 // pred_fallthru
      _
    // Predicated region
    $region18: #{esamble_forward.1} parent=1 // pred_check
      _
    $region19: #{esamble_forward.1} parent=1 // pred_check_branch
      %76 = sbr.rel (0) target = $region21
    $region20: #{esamble_forward.1} parent=1 // pred_region
      _
    $region21: #{esamble_forward.1} parent=1 // pred_fallthru
      _
    // Predicated region
    $region22: #{esamble_forward.1} parent=1 // pred_check
      _
    $region23: #{esamble_forward.1} parent=1 // pred_check_branch
      %78 = sbr.rel (0) target = $region25
    $region24: #{esamble_forward.1} parent=1 // pred_region
      _
    $region25: #{esamble_forward.1} parent=1 // pred_fallthru
      _
    // Predicated region
    $region26: #{esamble_forward.1} parent=1 // pred_check
      _
    $region27: #{esamble_forward.1} parent=1 // pred_check_branch
      %80 = sbr.rel (0) target = $region29
    $region28: #{esamble_forward.1} parent=1 // pred_region
      _
    $region29: #{esamble_forward.1} parent=1 // pred_fallthru
      _
    // Predicated region
    $region30: #{esamble_forward.1} parent=1 // pred_check
      _
    $region31: #{esamble_forward.1} parent=1 // pred_check_branch
      %82 = sbr.rel (0) target = $region33
    $region32: #{esamble_forward.1} parent=1 // pred_region
      _
    $region33: #{esamble_forward.1} parent=1 // pred_fallthru
      _
    // Predicated region
    $region34: #{esamble_forward.1} parent=1 // pred_check
      _
    $region35: #{esamble_forward.1} parent=1 // pred_check_branch
      %84 = sbr.rel (0) target = $region37
    $region36: #{esamble_forward.1} parent=1 // pred_region
      _
    $region37: #{esamble_forward.1} parent=1 // pred_fallthru
      _
    // Predicated region
    $region38: #{esamble_forward.1} parent=1 // pred_check
      _
    $region39: #{esamble_forward.1} parent=1 // pred_check_branch
      %86 = sbr.rel (0) target = $region41
    $region40: #{esamble_forward.1} parent=1 // pred_region
      _
    $region41: #{esamble_forward.1} parent=1 // pred_fallthru
      _
    // Predicated region
    $region42: #{esamble_forward.1} parent=1 // pred_check
      _
    $region43: #{esamble_forward.1} parent=1 // pred_check_branch
      %88 = sbr.rel (0) target = $region45
    $region44: #{esamble_forward.1} parent=1 // pred_region
      _
    $region45: #{esamble_forward.1} parent=1 // pred_fallthru
      _
    // Predicated region
    $region46: #{esamble_forward.1} parent=1 // pred_check
      _
    $region47: #{esamble_forward.1} parent=1 // pred_check_branch
      %90 = sbr.rel (0) target = $region49
    $region48: #{esamble_forward.1} parent=1 // pred_region
      _
    $region49: #{esamble_forward.1} parent=1 // pred_fallthru
      _
    // Predicated region
    $region50: #{esamble_forward.1} parent=1 // pred_check
      _
    $region51: #{esamble_forward.1} parent=1 // pred_check_branch
      %92 = sbr.rel (0) target = $region53
    $region52: #{esamble_forward.1} parent=1 // pred_region
      _
    $region53: #{esamble_forward.1} parent=1 // pred_fallthru
      _
    // Predicated region
    $region54: #{esamble_forward.1} parent=1 // pred_check
      _
    $region55: #{esamble_forward.1} parent=1 // pred_check_branch
      %94 = sbr.rel (0) target = $region57
    $region56: #{esamble_forward.1} parent=1 // pred_region
      _
    $region57: #{esamble_forward.1} parent=1 // pred_fallthru
      _
    // Predicated region
    $region58: #{esamble_forward.1} parent=1 // pred_check
      _
    $region59: #{esamble_forward.1} parent=1 // pred_check_branch
      %96 = sbr.rel (0) target = $region61
    $region60: #{esamble_forward.1} parent=1 // pred_region
      _
    $region61: #{esamble_forward.1} parent=1 // pred_fallthru
      _
    // Predicated region
    $region62: #{esamble_forward.1} parent=1 // pred_check
      _
    $region63: #{esamble_forward.1} parent=1 // pred_check_branch
      %98 = sbr.rel (0) target = $region65
    $region64: #{esamble_forward.1} parent=1 // pred_region
      _
    $region65: #{esamble_forward.1} parent=1 // pred_fallthru
      _
    // Predicated region
    $region66: #{esamble_forward.1} parent=1 // pred_check
      _
    $region67: #{esamble_forward.1} parent=1 // pred_check_branch
      %100 = sbr.rel (0) target = $region69
    $region68: #{esamble_forward.1} parent=1 // pred_region
      _
    $region69: #{esamble_forward.1} parent=1 // pred_fallthru
      _
    // Predicated region
    $region70: #{esamble_forward.1} parent=1 // pred_check
      _
    $region71: #{esamble_forward.1} parent=1 // pred_check_branch
      %102 = sbr.rel (0) target = $region73
    $region72: #{esamble_forward.1} parent=1 // pred_region
      _
    $region73: #{esamble_forward.1} parent=1 // pred_fallthru
      _
    // Predicated region
    $region74: #{esamble_forward.1} parent=1 // pred_check
      _
    $region75: #{esamble_forward.1} parent=1 // pred_check_branch
      %104 = sbr.rel (0) target = $region77
    $region76: #{esamble_forward.1} parent=1 // pred_region
      _
    $region77: #{esamble_forward.1} parent=1 // pred_fallthru
      _
    // Predicated region
    $region78: #{esamble_forward.1} parent=1 // pred_check
      _
    $region79: #{esamble_forward.1} parent=1 // pred_check_branch
      %106 = sbr.rel (0) target = $region81
    $region80: #{esamble_forward.1} parent=1 // pred_region
      _
    $region81: #{esamble_forward.1} parent=1 // pred_fallthru
      _
    // Predicated region
    $region82: #{esamble_forward.1} parent=1 // pred_check
      _
    $region83: #{esamble_forward.1} parent=1 // pred_check_branch
      %108 = sbr.rel (0) target = $region85
    $region84: #{esamble_forward.1} parent=1 // pred_region
      _
    $region85: #{esamble_forward.1} parent=1 // pred_fallthru
      _
    // Predicated region
    $region86: #{esamble_forward.1} parent=1 // pred_check
      _
    $region87: #{esamble_forward.1} parent=1 // pred_check_branch
      %110 = sbr.rel (0) target = $region89
    $region88: #{esamble_forward.1} parent=1 // pred_region
      _
    $region89: #{esamble_forward.1} parent=1 // pred_fallthru
      _
    // Predicated region
    $region90: #{esamble_forward.1} parent=1 // pred_check
      _
    $region91: #{esamble_forward.1} parent=1 // pred_check_branch
      %112 = sbr.rel (0) target = $region93
    $region92: #{esamble_forward.1} parent=1 // pred_region
      _
    $region93: #{esamble_forward.1} parent=1 // pred_fallthru
      _
    // Predicated region
    $region94: #{esamble_forward.1} parent=1 // pred_check
      _
    $region95: #{esamble_forward.1} parent=1 // pred_check_branch
      %114 = sbr.rel (0) target = $region97
    $region96: #{esamble_forward.1} parent=1 // pred_region
      _
    $region97: #{esamble_forward.1} parent=1 // pred_fallthru
      _
    // Predicated region
    $region98: #{esamble_forward.1} parent=1 // pred_check
      _
    $region99: #{esamble_forward.1} parent=1 // pred_check_branch
      %116 = sbr.rel (0) target = $region101
    $region100: #{esamble_forward.1} parent=1 // pred_region
      _
    $region101: #{esamble_forward.1} parent=1 // pred_fallthru
      _
    // Predicated region
    $region102: #{esamble_forward.1} parent=1 // pred_check
      _
    $region103: #{esamble_forward.1} parent=1 // pred_check_branch
      %118 = sbr.rel (0) target = $region105
    $region104: #{esamble_forward.1} parent=1 // pred_region
      _
    $region105: #{esamble_forward.1} parent=1 // pred_fallthru
      _
    // Predicated region
    $region106: #{esamble_forward.1} parent=1 // pred_check
      _
    $region107: #{esamble_forward.1} parent=1 // pred_check_branch
      %120 = sbr.rel (0) target = $region109
    $region108: #{esamble_forward.1} parent=1 // pred_region
      _
    $region109: #{esamble_forward.1} parent=1 // pred_fallthru
      _
    // Predicated region
    $region110: #{esamble_forward.1} parent=1 // pred_check
      _
    $region111: #{esamble_forward.1} parent=1 // pred_check_branch
      %122 = sbr.rel (0) target = $region113
    $region112: #{esamble_forward.1} parent=1 // pred_region
      _
    $region113: #{esamble_forward.1} parent=1 // pred_fallthru
      _
    // Predicated region
    $region114: #{esamble_forward.1} parent=1 // pred_check
      _
    $region115: #{esamble_forward.1} parent=1 // pred_check_branch
      %124 = sbr.rel (0) target = $region117
    $region116: #{esamble_forward.1} parent=1 // pred_region
      _
    $region117: #{esamble_forward.1} parent=1 // pred_fallthru
      _
    %v125 = vld [vmem:[%s1] sm:$0xff]
    %v126 = vld [vmem:[%s9] sm:$0xff]
    %v127 = vld [vmem:[%s9 + $0x8] sm:$0xff]
    %v128 = vld [vmem:[%s9 + $0x10] sm:$0xff]
    %v129 = vld [vmem:[%s9 + $0x18] sm:$0xff]
    %v130 = vld [vmem:[%s9 + $0x20] sm:$0xff]
    %v131 = vld [vmem:[%s9 + $0x28] sm:$0xff]
    %v132 = vld [vmem:[%s9 + $0x30] sm:$0xff]
    %v133 = vld [vmem:[%s9 + $0x38] sm:$0xff]
    %v134 = vld [vmem:[%s9 + $0x40] sm:$0xff]
    %v135 = vld [vmem:[%s9 + $0x48] sm:$0xff]
    %v136 = vld [vmem:[%s9 + $0x50] sm:$0xff]
    %v137 = vld [vmem:[%s9 + $0x58] sm:$0xff]
    %v138 = vld [vmem:[%s9 + $0x60] sm:$0xff]
    %v139 = vld [vmem:[%s9 + $0x68] sm:$0xff]
    %v140 = vld [vmem:[%s9 + $0x70] sm:$0xff]
    %v141 = vld [vmem:[%s9 + $0x78] sm:$0xff]
    %v142 = vld [vmem:[%s9 + $0x80] sm:$0xff]
    %v143 = vld [vmem:[%s9 + $0x88] sm:$0xff]
    %v144 = vld [vmem:[%s9 + $0x90] sm:$0xff]
    %v145 = vld [vmem:[%s9 + $0x98] sm:$0xff]
    %v146 = vld [vmem:[%s9 + $0xa0] sm:$0xff]
    %v147 = vld [vmem:[%s9 + $0xa8] sm:$0xff]
    %v148 = vld [vmem:[%s9 + $0xb0] sm:$0xff]
    %v149 = vld [vmem:[%s9 + $0xb8] sm:$0xff]
    %v150 = vld [vmem:[%s9 + $0xc0] sm:$0xff]
    %v151 = vld [vmem:[%s9 + $0xc8] sm:$0xff]
    %v152 = vld [vmem:[%s9 + $0xd0] sm:$0xff]
    %v153 = vld [vmem:[%s9 + $0xd8] sm:$0xff]
    %v154 = vld [vmem:[%s9 + $0xe0] sm:$0xff]
    %v155 = vld [vmem:[%s9 + $0xe8] sm:$0xff]
    %v156 = vld [vmem:[%s9 + $0xf0] sm:$0xff]
    %v157 = vld [vmem:[%s9 + $0xf8] sm:$0xff]
    %v158 = vld [vmem:[%s9 + $0x100] sm:$0xff]
    %v159 = vld [vmem:[%s9 + $0x108] sm:$0xff]
    %v160 = vld [vmem:[%s9 + $0x110] sm:$0xff]
    %v161 = vld [vmem:[%s9 + $0x118] sm:$0xff]
    %v162 = vld [vmem:[%s9 + $0x120] sm:$0xff]
    %v163 = vld [vmem:[%s9 + $0x128] sm:$0xff]
    %v164 = vld [vmem:[%s9 + $0x130] sm:$0xff]
    %v165 = vld [vmem:[%s9 + $0x138] sm:$0xff]
    %v166 = vld [vmem:[%s9 + $0x140] sm:$0xff]
    %v167 = vld [vmem:[%s9 + $0x148] sm:$0xff]
    %v168 = vld [vmem:[%s9 + $0x150] sm:$0xff]
    %v169 = vld [vmem:[%s9 + $0x158] sm:$0xff]
    %v170 = vld [vmem:[%s9 + $0x160] sm:$0xff]
    %v171 = vld [vmem:[%s9 + $0x168] sm:$0xff]
    %v172 = vld [vmem:[%s9 + $0x170] sm:$0xff]
    %v173 = vld [vmem:[%s9 + $0x178] sm:$0xff]
    %v174 = vld [vmem:[%s9 + $0x180] sm:$0xff]
    %v175 = vld [vmem:[%s9 + $0x188] sm:$0xff]
    %v176 = vld [vmem:[%s9 + $0x190] sm:$0xff]
    %v177 = vld [vmem:[%s9 + $0x198] sm:$0xff]
    %v178 = vld [vmem:[%s9 + $0x1a0] sm:$0xff]
    %v179 = vld [vmem:[%s9 + $0x1a8] sm:$0xff]
    %v180 = vld [vmem:[%s9 + $0x1b0] sm:$0xff]
    %v181 = vld [vmem:[%s9 + $0x1b8] sm:$0xff]
    %v182 = vld [vmem:[%s9 + $0x1c0] sm:$0xff]
    %v183 = vld [vmem:[%s9 + $0x1c8] sm:$0xff]
    %v184 = vld [vmem:[%s9 + $0x1d0] sm:$0xff]
    %v185 = vld [vmem:[%s9 + $0x1d8] sm:$0xff]
    %v186 = vld [vmem:[%s9 + $0x1e0] sm:$0xff]
    %v187 = vld [vmem:[%s9 + $0x1e8] sm:$0xff]
    %v188 = vld [vmem:[%s9 + $0x1f0] sm:$0xff]
    %v189 = vld [vmem:[%s9 + $0x1f8] sm:$0xff]
    %v190 = vld [vmem:[%s11] sm:$0x1]
    %v192 = vperm.slane %v190, 0
    %195 = vst [vmem:[#allocation1] ss:$4 sm:$0xff] %v125
    %v196 = vld.sshfl [vmem:[#allocation1] sm:$0xff pattern:$0x73625140]
    %v197 = vld.sshfl [vmem:[#allocation1 + $0x8] sm:$0xff pattern:$0x73625140]
    %v198 = vld.sshfl [vmem:[#allocation1 + $0x10] sm:$0xff pattern:$0x73625140]
    %v199 = vld.sshfl [vmem:[#allocation1 + $0x18] sm:$0xff pattern:$0x73625140]
    %204 = vmatpush.msra.mxu0 %v141
    %205 = vmatpush.msra.mxu0 %v140
    %206 = vmatpush.msra.mxu0 %v139
    %207 = vmatpush.msra.mxu0 %v138
    %208 = vmatpush.msra.mxu0 %v137
    %209 = vmatpush.msra.mxu0 %v136
    %210 = vmatpush.msra.mxu0 %v135
    %211 = vmatpush.msra.mxu0 %v134
    %212 = vmatpush.msra.mxu0 %v133
    %213 = vmatpush.msra.mxu0 %v132
    %214 = vmatpush.msra.mxu0 %v131
    %215 = vmatpush.msra.mxu0 %v130
    %216 = vmatpush.msra.mxu0 %v129
    %217 = vmatpush.msra.mxu0 %v128
    %218 = vmatpush.msra.mxu0 %v127
    %219 = vmatpush.msra.mxu0 %v126
    %220 = vmatmul.f32.gmra.mxu0 %v196
    %v221 = vpop.f32.mrf.mxu0
    %v222 = vadd.f32 %v192, %v221
    %223 = vdwg.mxu0
    %224 = vmatpush.msra.mxu0 %v157
    %225 = vmatpush.msra.mxu0 %v156
    %226 = vmatpush.msra.mxu0 %v155
    %227 = vmatpush.msra.mxu0 %v154
    %228 = vmatpush.msra.mxu0 %v153
    %229 = vmatpush.msra.mxu0 %v152
    %230 = vmatpush.msra.mxu0 %v151
    %231 = vmatpush.msra.mxu0 %v150
    %232 = vmatpush.msra.mxu0 %v149
    %233 = vmatpush.msra.mxu0 %v148
    %234 = vmatpush.msra.mxu0 %v147
    %235 = vmatpush.msra.mxu0 %v146
    %236 = vmatpush.msra.mxu0 %v145
    %237 = vmatpush.msra.mxu0 %v144
    %238 = vmatpush.msra.mxu0 %v143
    %239 = vmatpush.msra.mxu0 %v142
    %240 = vmatmul.f32.gmra.mxu0 %v197
    %v241 = vpop.f32.mrf.mxu0
    %v242 = vadd.f32 %v222, %v241
    %243 = vdwg.mxu0
    %244 = vmatpush.msra.mxu0 %v173
    %245 = vmatpush.msra.mxu0 %v172
    %246 = vmatpush.msra.mxu0 %v171
    %247 = vmatpush.msra.mxu0 %v170
    %248 = vmatpush.msra.mxu0 %v169
    %249 = vmatpush.msra.mxu0 %v168
    %250 = vmatpush.msra.mxu0 %v167
    %251 = vmatpush.msra.mxu0 %v166
    %252 = vmatpush.msra.mxu0 %v165
    %253 = vmatpush.msra.mxu0 %v164
    %254 = vmatpush.msra.mxu0 %v163
    %255 = vmatpush.msra.mxu0 %v162
    %256 = vmatpush.msra.mxu0 %v161
    %257 = vmatpush.msra.mxu0 %v160
    %258 = vmatpush.msra.mxu0 %v159
    %259 = vmatpush.msra.mxu0 %v158
    %260 = vmatmul.f32.gmra.mxu0 %v198
    %v261 = vpop.f32.mrf.mxu0
    %v262 = vadd.f32 %v242, %v261
    %263 = vdwg.mxu0
    %264 = vmatpush.msra.mxu0 %v189
    %265 = vmatpush.msra.mxu0 %v188
    %266 = vmatpush.msra.mxu0 %v187
    %267 = vmatpush.msra.mxu0 %v186
    %268 = vmatpush.msra.mxu0 %v185
    %269 = vmatpush.msra.mxu0 %v184
    %270 = vmatpush.msra.mxu0 %v183
    %271 = vmatpush.msra.mxu0 %v182
    %272 = vmatpush.msra.mxu0 %v181
    %273 = vmatpush.msra.mxu0 %v180
    %274 = vmatpush.msra.mxu0 %v179
    %275 = vmatpush.msra.mxu0 %v178
    %276 = vmatpush.msra.mxu0 %v177
    %277 = vmatpush.msra.mxu0 %v176
    %278 = vmatpush.msra.mxu0 %v175
    %279 = vmatpush.msra.mxu0 %v174
    %280 = vmatmul.f32.gmra.mxu0 %v199
    %v281 = vpop.f32.mrf.mxu0
    %v282 = vadd.f32 %v262, %v281
    %283 = vdwg.mxu0
    %v284 = vmax.f32 %v282, 0.0
    %v285 = vld [vmem:[%s3] sm:$0x3]
    %v286 = vld [vmem:[%s5] sm:$0xff]
    %v287 = vld [vmem:[%s5 + $0x8] sm:$0xff]
    %v288 = vld [vmem:[%s5 + $0x10] sm:$0xff]
    %v289 = vld [vmem:[%s5 + $0x18] sm:$0xff]
    %v290 = vld [vmem:[%s13] sm:$0xff]
    %v291 = vld [vmem:[%s15] sm:$0x1]
    %v293 = vperm.slane %v291, 0
    %vm295 = vcmask 64512
    %v297 = vsel %vm295, %v286, 0
    %v300 = vsel %vm295, %v287, 0
    %v303 = vsel %vm295, %v288, 0
    %v306 = vsel %vm295, %v289, 0
    %308 = vmatpush.msra.mxu0 0.0
    %309 = vmatpush.msra.mxu0 0.0
    %310 = vmatpush.msra.mxu0 0.0
    %311 = vmatpush.msra.mxu0 0.0
    %312 = vmatpush.msra.mxu0 0.0
    %313 = vmatpush.msra.mxu0 0.0
    %314 = vmatpush.msra.mxu0 0.0
    %315 = vmatpush.msra.mxu0 0.0
    %316 = vmatpush.msra.mxu0 0.0
    %317 = vmatpush.msra.mxu0 0.0
    %318 = vmatpush.msra.mxu0 0.0
    %319 = vmatpush.msra.mxu0 0.0
    %320 = vmatpush.msra.mxu0 0.0
    %321 = vmatpush.msra.mxu0 0.0
    %322 = vmatpush.msra.mxu0 0.0
    %323 = vmatpush.msra.mxu0 %v290
    %324 = vmatmul.f32.gmra.mxu0 %v297
    %v325 = vpop.f32.mrf.mxu0
    %v326 = vadd.f32 %v293, %v325
    %327 = vmatmul.f32.gmra.mxu0 %v300
    %v328 = vpop.f32.mrf.mxu0
    %v329 = vadd.f32 %v293, %v328
    %330 = vmatmul.f32.gmra.mxu0 %v303
    %v331 = vpop.f32.mrf.mxu0
    %v332 = vadd.f32 %v293, %v331
    %333 = vmatmul.f32.gmra.mxu0 %v306
    %v334 = vpop.f32.mrf.mxu0
    %v335 = vadd.f32 %v293, %v334
    %336 = vdwg.mxu0
    %v337 = vmax.f32 %v326, 0.0
    %v338 = vmax.f32 %v329, 0.0
    %v339 = vmax.f32 %v332, 0.0
    %v340 = vmax.f32 %v335, 0.0
    %v341 = vld [vmem:[%s7] sm:$0x3]
    %vm342 = vcmask 261120
    %v344 = vsel %vm342, %v341, 0
    %346 = vmatpush.msra.mxu0 0.0
    %347 = vmatpush.msra.mxu0 0.0
    %348 = vmatpush.msra.mxu0 0.0
    %349 = vmatpush.msra.mxu0 0.0
    %350 = vmatpush.msra.mxu0 0.0
    %351 = vmatpush.msra.mxu0 0.0
    %352 = vmatpush.msra.mxu0 0.0
    %353 = vmatpush.msra.mxu0 0.0
    %354 = vmatpush.msra.mxu0 0.0
    %355 = vmatpush.msra.mxu0 0.0
    %356 = vmatpush.msra.mxu0 0.0
    %357 = vmatpush.msra.mxu0 0.0
    %358 = vmatpush.msra.mxu0 %v340
    %359 = vmatpush.msra.mxu0 %v339
    %360 = vmatpush.msra.mxu0 %v338
    %361 = vmatpush.msra.mxu0 %v337
    %362 = vmatmul.f32.gmra.mxu0 %v344
    %v363 = vpop.f32.mrf.mxu0
    %v364 = vadd.f32 0.0, %v363
    %365 = vdwg.mxu0
    %v366 = vld [vmem:[%s17] sm:$0xff]
    %v367 = vld [vmem:[%s17 + $0x8] sm:$0xff]
    %v368 = vld [vmem:[%s17 + $0x10] sm:$0xff]
    %v369 = vld [vmem:[%s17 + $0x18] sm:$0xff]
    %v370 = vld [vmem:[%s17 + $0x20] sm:$0xff]
    %v371 = vld [vmem:[%s17 + $0x28] sm:$0xff]
    %v372 = vld [vmem:[%s17 + $0x30] sm:$0xff]
    %v373 = vld [vmem:[%s17 + $0x38] sm:$0xff]
    %v374 = vld [vmem:[%s17 + $0x40] sm:$0xff]
    %v375 = vld [vmem:[%s17 + $0x48] sm:$0xff]
    %v376 = vld [vmem:[%s17 + $0x50] sm:$0xff]
    %v377 = vld [vmem:[%s17 + $0x58] sm:$0xff]
    %v378 = vld [vmem:[%s17 + $0x60] sm:$0xff]
    %v379 = vld [vmem:[%s17 + $0x68] sm:$0xff]
    %v380 = vld [vmem:[%s17 + $0x70] sm:$0xff]
    %v381 = vld [vmem:[%s17 + $0x78] sm:$0xff]
    %s382 = scalar_lea.vmem %s7, 2
    %v383 = vld [vmem:[%s382] sm:$0x3]
    %v385 = vsel %vm342, %v383, 0
    %387 = vmatpush.msra.mxu0 0.0
    %388 = vmatpush.msra.mxu0 0.0
    %389 = vmatpush.msra.mxu0 0.0
    %390 = vmatpush.msra.mxu0 0.0
    %391 = vmatpush.msra.mxu0 0.0
    %392 = vmatpush.msra.mxu0 0.0
    %393 = vmatpush.msra.mxu0 0.0
    %394 = vmatpush.msra.mxu0 0.0
    %395 = vmatpush.msra.mxu0 0.0
    %396 = vmatpush.msra.mxu0 0.0
    %397 = vmatpush.msra.mxu0 0.0
    %398 = vmatpush.msra.mxu0 0.0
    %399 = vmatpush.msra.mxu0 %v340
    %400 = vmatpush.msra.mxu0 %v339
    %401 = vmatpush.msra.mxu0 %v338
    %402 = vmatpush.msra.mxu0 %v337
    %403 = vmatmul.f32.gmra.mxu0 %v385
    %v404 = vpop.f32.mrf.mxu0
    %v405 = vadd.f32 0.0, %v404
    %406 = vdwg.mxu0
    %s407 = scalar_lea.vmem %s17, 128
    %v408 = vld [vmem:[%s407] sm:$0xff]
    %v409 = vld [vmem:[%s407 + $0x8] sm:$0xff]
    %v410 = vld [vmem:[%s407 + $0x10] sm:$0xff]
    %v411 = vld [vmem:[%s407 + $0x18] sm:$0xff]
    %v412 = vld [vmem:[%s407 + $0x20] sm:$0xff]
    %v413 = vld [vmem:[%s407 + $0x28] sm:$0xff]
    %v414 = vld [vmem:[%s407 + $0x30] sm:$0xff]
    %v415 = vld [vmem:[%s407 + $0x38] sm:$0xff]
    %v416 = vld [vmem:[%s407 + $0x40] sm:$0xff]
    %v417 = vld [vmem:[%s407 + $0x48] sm:$0xff]
    %v418 = vld [vmem:[%s407 + $0x50] sm:$0xff]
    %v419 = vld [vmem:[%s407 + $0x58] sm:$0xff]
    %v420 = vld [vmem:[%s407 + $0x60] sm:$0xff]
    %v421 = vld [vmem:[%s407 + $0x68] sm:$0xff]
    %v422 = vld [vmem:[%s407 + $0x70] sm:$0xff]
    %v423 = vld [vmem:[%s407 + $0x78] sm:$0xff]
    %424 = vmatpush.msra.mxu0 %v423
    %425 = vmatpush.msra.mxu0 %v422
    %426 = vmatpush.msra.mxu0 %v421
    %427 = vmatpush.msra.mxu0 %v420
    %428 = vmatpush.msra.mxu0 %v419
    %429 = vmatpush.msra.mxu0 %v418
    %430 = vmatpush.msra.mxu0 %v417
    %431 = vmatpush.msra.mxu0 %v416
    %432 = vmatpush.msra.mxu0 %v415
    %433 = vmatpush.msra.mxu0 %v414
    %434 = vmatpush.msra.mxu0 %v413
    %435 = vmatpush.msra.mxu0 %v412
    %436 = vmatpush.msra.mxu0 %v411
    %437 = vmatpush.msra.mxu0 %v410
    %438 = vmatpush.msra.mxu0 %v409
    %439 = vmatpush.msra.mxu0 %v408
    %440 = vmatmul.f32.gmra.mxu0 %v405
    %v441 = vpop.f32.mrf.mxu0
    %v442 = vadd.f32 0.0, %v441
    %443 = vdwg.mxu0
    %444 = vmatpush.msra.mxu0 %v381
    %445 = vmatpush.msra.mxu0 %v380
    %446 = vmatpush.msra.mxu0 %v379
    %447 = vmatpush.msra.mxu0 %v378
    %448 = vmatpush.msra.mxu0 %v377
    %449 = vmatpush.msra.mxu0 %v376
    %450 = vmatpush.msra.mxu0 %v375
    %451 = vmatpush.msra.mxu0 %v374
    %452 = vmatpush.msra.mxu0 %v373
    %453 = vmatpush.msra.mxu0 %v372
    %454 = vmatpush.msra.mxu0 %v371
    %455 = vmatpush.msra.mxu0 %v370
    %456 = vmatpush.msra.mxu0 %v369
    %457 = vmatpush.msra.mxu0 %v368
    %458 = vmatpush.msra.mxu0 %v367
    %459 = vmatpush.msra.mxu0 %v366
    %460 = vmatmul.f32.gmra.mxu0 %v364
    %v461 = vpop.f32.mrf.mxu0
    %v462 = vadd.f32 %v442, %v461
    %463 = vdwg.mxu0
    %s464 = scalar_lea.vmem %s7, 4
    %v465 = vld [vmem:[%s464] sm:$0x3]
    %v467 = vsel %vm342, %v465, 0
    %469 = vmatpush.msra.mxu0 0.0
    %470 = vmatpush.msra.mxu0 0.0
    %471 = vmatpush.msra.mxu0 0.0
    %472 = vmatpush.msra.mxu0 0.0
    %473 = vmatpush.msra.mxu0 0.0
    %474 = vmatpush.msra.mxu0 0.0
    %475 = vmatpush.msra.mxu0 0.0
    %476 = vmatpush.msra.mxu0 0.0
    %477 = vmatpush.msra.mxu0 0.0
    %478 = vmatpush.msra.mxu0 0.0
    %479 = vmatpush.msra.mxu0 0.0
    %480 = vmatpush.msra.mxu0 0.0
    %481 = vmatpush.msra.mxu0 %v340
    %482 = vmatpush.msra.mxu0 %v339
    %483 = vmatpush.msra.mxu0 %v338
    %484 = vmatpush.msra.mxu0 %v337
    %485 = vmatmul.f32.gmra.mxu0 %v467
    %v486 = vpop.f32.mrf.mxu0
    %v487 = vadd.f32 0.0, %v486
    %488 = vdwg.mxu0
    %s489 = scalar_lea.vmem %s17, 256
    %v490 = vld [vmem:[%s489] sm:$0xff]
    %v491 = vld [vmem:[%s489 + $0x8] sm:$0xff]
    %v492 = vld [vmem:[%s489 + $0x10] sm:$0xff]
    %v493 = vld [vmem:[%s489 + $0x18] sm:$0xff]
    %v494 = vld [vmem:[%s489 + $0x20] sm:$0xff]
    %v495 = vld [vmem:[%s489 + $0x28] sm:$0xff]
    %v496 = vld [vmem:[%s489 + $0x30] sm:$0xff]
    %v497 = vld [vmem:[%s489 + $0x38] sm:$0xff]
    %v498 = vld [vmem:[%s489 + $0x40] sm:$0xff]
    %v499 = vld [vmem:[%s489 + $0x48] sm:$0xff]
    %v500 = vld [vmem:[%s489 + $0x50] sm:$0xff]
    %v501 = vld [vmem:[%s489 + $0x58] sm:$0xff]
    %v502 = vld [vmem:[%s489 + $0x60] sm:$0xff]
    %v503 = vld [vmem:[%s489 + $0x68] sm:$0xff]
    %v504 = vld [vmem:[%s489 + $0x70] sm:$0xff]
    %v505 = vld [vmem:[%s489 + $0x78] sm:$0xff]
    %506 = vmatpush.msra.mxu0 %v505
    %507 = vmatpush.msra.mxu0 %v504
    %508 = vmatpush.msra.mxu0 %v503
    %509 = vmatpush.msra.mxu0 %v502
    %510 = vmatpush.msra.mxu0 %v501
    %511 = vmatpush.msra.mxu0 %v500
    %512 = vmatpush.msra.mxu0 %v499
    %513 = vmatpush.msra.mxu0 %v498
    %514 = vmatpush.msra.mxu0 %v497
    %515 = vmatpush.msra.mxu0 %v496
    %516 = vmatpush.msra.mxu0 %v495
    %517 = vmatpush.msra.mxu0 %v494
    %518 = vmatpush.msra.mxu0 %v493
    %519 = vmatpush.msra.mxu0 %v492
    %520 = vmatpush.msra.mxu0 %v491
    %521 = vmatpush.msra.mxu0 %v490
    %522 = vmatmul.f32.gmra.mxu0 %v487
    %v523 = vpop.f32.mrf.mxu0
    %v524 = vadd.f32 0.0, %v523
    %525 = vdwg.mxu0
    %v526 = vadd.f32 %v462, %v524
    %s527 = scalar_lea.vmem %s7, 6
    %v528 = vld [vmem:[%s527] sm:$0x3]
    %v530 = vsel %vm342, %v528, 0
    %532 = vmatpush.msra.mxu0 0.0
    %533 = vmatpush.msra.mxu0 0.0
    %534 = vmatpush.msra.mxu0 0.0
    %535 = vmatpush.msra.mxu0 0.0
    %536 = vmatpush.msra.mxu0 0.0
    %537 = vmatpush.msra.mxu0 0.0
    %538 = vmatpush.msra.mxu0 0.0
    %539 = vmatpush.msra.mxu0 0.0
    %540 = vmatpush.msra.mxu0 0.0
    %541 = vmatpush.msra.mxu0 0.0
    %542 = vmatpush.msra.mxu0 0.0
    %543 = vmatpush.msra.mxu0 0.0
    %544 = vmatpush.msra.mxu0 %v340
    %545 = vmatpush.msra.mxu0 %v339
    %546 = vmatpush.msra.mxu0 %v338
    %547 = vmatpush.msra.mxu0 %v337
    %548 = vmatmul.f32.gmra.mxu0 %v530
    %v549 = vpop.f32.mrf.mxu0
    %v550 = vadd.f32 0.0, %v549
    %551 = vdwg.mxu0
    %s552 = scalar_lea.vmem %s17, 384
    %v553 = vld [vmem:[%s552] sm:$0xff]
    %v554 = vld [vmem:[%s552 + $0x8] sm:$0xff]
    %v555 = vld [vmem:[%s552 + $0x10] sm:$0xff]
    %v556 = vld [vmem:[%s552 + $0x18] sm:$0xff]
    %v557 = vld [vmem:[%s552 + $0x20] sm:$0xff]
    %v558 = vld [vmem:[%s552 + $0x28] sm:$0xff]
    %v559 = vld [vmem:[%s552 + $0x30] sm:$0xff]
    %v560 = vld [vmem:[%s552 + $0x38] sm:$0xff]
    %v561 = vld [vmem:[%s552 + $0x40] sm:$0xff]
    %v562 = vld [vmem:[%s552 + $0x48] sm:$0xff]
    %v563 = vld [vmem:[%s552 + $0x50] sm:$0xff]
    %v564 = vld [vmem:[%s552 + $0x58] sm:$0xff]
    %v565 = vld [vmem:[%s552 + $0x60] sm:$0xff]
    %v566 = vld [vmem:[%s552 + $0x68] sm:$0xff]
    %v567 = vld [vmem:[%s552 + $0x70] sm:$0xff]
    %v568 = vld [vmem:[%s552 + $0x78] sm:$0xff]
    %569 = vmatpush.msra.mxu0 %v568
    %570 = vmatpush.msra.mxu0 %v567
    %571 = vmatpush.msra.mxu0 %v566
    %572 = vmatpush.msra.mxu0 %v565
    %573 = vmatpush.msra.mxu0 %v564
    %574 = vmatpush.msra.mxu0 %v563
    %575 = vmatpush.msra.mxu0 %v562
    %576 = vmatpush.msra.mxu0 %v561
    %577 = vmatpush.msra.mxu0 %v560
    %578 = vmatpush.msra.mxu0 %v559
    %579 = vmatpush.msra.mxu0 %v558
    %580 = vmatpush.msra.mxu0 %v557
    %581 = vmatpush.msra.mxu0 %v556
    %582 = vmatpush.msra.mxu0 %v555
    %583 = vmatpush.msra.mxu0 %v554
    %584 = vmatpush.msra.mxu0 %v553
    %585 = vmatmul.f32.gmra.mxu0 %v550
    %v586 = vpop.f32.mrf.mxu0
    %v587 = vadd.f32 0.0, %v586
    %588 = vdwg.mxu0
    %v589 = vadd.f32 %v526, %v587
    %v590 = vld [vmem:[%s19] sm:$0x1]
    %v592 = vperm.slane %v590, 0
    %v594 = vadd.f32 %v589, %v592
    %v595 = vmax.f32 %v594, 0.0
    %v596 = vld [vmem:[%s21] sm:$0xff]
    %v597 = vld [vmem:[%s21 + $0x8] sm:$0xff]
    %v598 = vld [vmem:[%s21 + $0x10] sm:$0xff]
    %v599 = vld [vmem:[%s21 + $0x18] sm:$0xff]
    %v600 = vld [vmem:[%s23] sm:$0xff]
    %v601 = vld [vmem:[%s23 + $0x8] sm:$0xff]
    %v602 = vld [vmem:[%s23 + $0x10] sm:$0xff]
    %v603 = vld [vmem:[%s23 + $0x18] sm:$0xff]
    %v605 = vsel %vm342, %v285, 0
    %607 = vmatpush.msra.mxu0 0.0
    %608 = vmatpush.msra.mxu0 0.0
    %609 = vmatpush.msra.mxu0 0.0
    %610 = vmatpush.msra.mxu0 0.0
    %611 = vmatpush.msra.mxu0 0.0
    %612 = vmatpush.msra.mxu0 0.0
    %613 = vmatpush.msra.mxu0 0.0
    %614 = vmatpush.msra.mxu0 0.0
    %615 = vmatpush.msra.mxu0 0.0
    %616 = vmatpush.msra.mxu0 0.0
    %617 = vmatpush.msra.mxu0 0.0
    %618 = vmatpush.msra.mxu0 0.0
    %619 = vmatpush.msra.mxu0 %v603
    %620 = vmatpush.msra.mxu0 %v602
    %621 = vmatpush.msra.mxu0 %v601
    %622 = vmatpush.msra.mxu0 %v600
    %623 = vmatmul.f32.gmra.mxu0 %v605
    %v624 = vpop.f32.mrf.mxu0
    %v625 = vadd.f32 0.0, %v624
    %626 = vdwg.mxu0
    %v628 = vsel %vm342, %v284, 0
    %630 = vmatpush.msra.mxu0 0.0
    %631 = vmatpush.msra.mxu0 0.0
    %632 = vmatpush.msra.mxu0 0.0
    %633 = vmatpush.msra.mxu0 0.0
    %634 = vmatpush.msra.mxu0 0.0
    %635 = vmatpush.msra.mxu0 0.0
    %636 = vmatpush.msra.mxu0 0.0
    %637 = vmatpush.msra.mxu0 0.0
    %638 = vmatpush.msra.mxu0 0.0
    %639 = vmatpush.msra.mxu0 0.0
    %640 = vmatpush.msra.mxu0 0.0
    %641 = vmatpush.msra.mxu0 0.0
    %642 = vmatpush.msra.mxu0 %v599
    %643 = vmatpush.msra.mxu0 %v598
    %644 = vmatpush.msra.mxu0 %v597
    %645 = vmatpush.msra.mxu0 %v596
    %646 = vmatmul.f32.gmra.mxu0 %v628
    %v647 = vpop.f32.mrf.mxu0
    %v648 = vadd.f32 %v625, %v647
    %649 = vdwg.mxu0
    %v650 = vld [vmem:[%s25] sm:$0xff]
    %v651 = vld [vmem:[%s25 + $0x8] sm:$0xff]
    %v652 = vld [vmem:[%s25 + $0x10] sm:$0xff]
    %v653 = vld [vmem:[%s25 + $0x18] sm:$0xff]
    %v654 = vld [vmem:[%s25 + $0x20] sm:$0xff]
    %v655 = vld [vmem:[%s25 + $0x28] sm:$0xff]
    %v656 = vld [vmem:[%s25 + $0x30] sm:$0xff]
    %v657 = vld [vmem:[%s25 + $0x38] sm:$0xff]
    %v658 = vld [vmem:[%s25 + $0x40] sm:$0xff]
    %v659 = vld [vmem:[%s25 + $0x48] sm:$0xff]
    %v660 = vld [vmem:[%s25 + $0x50] sm:$0xff]
    %v661 = vld [vmem:[%s25 + $0x58] sm:$0xff]
    %v662 = vld [vmem:[%s25 + $0x60] sm:$0xff]
    %v663 = vld [vmem:[%s25 + $0x68] sm:$0xff]
    %v664 = vld [vmem:[%s25 + $0x70] sm:$0xff]
    %v665 = vld [vmem:[%s25 + $0x78] sm:$0xff]
    %666 = vmatpush.msra.mxu0 %v665
    %667 = vmatpush.msra.mxu0 %v664
    %668 = vmatpush.msra.mxu0 %v663
    %669 = vmatpush.msra.mxu0 %v662
    %670 = vmatpush.msra.mxu0 %v661
    %671 = vmatpush.msra.mxu0 %v660
    %672 = vmatpush.msra.mxu0 %v659
    %673 = vmatpush.msra.mxu0 %v658
    %674 = vmatpush.msra.mxu0 %v657
    %675 = vmatpush.msra.mxu0 %v656
    %676 = vmatpush.msra.mxu0 %v655
    %677 = vmatpush.msra.mxu0 %v654
    %678 = vmatpush.msra.mxu0 %v653
    %679 = vmatpush.msra.mxu0 %v652
    %680 = vmatpush.msra.mxu0 %v651
    %681 = vmatpush.msra.mxu0 %v650
    %682 = vmatmul.f32.gmra.mxu0 %v595
    %v683 = vpop.f32.mrf.mxu0
    %v684 = vadd.f32 0.0, %v683
    %685 = vdwg.mxu0
    %v686 = vadd.f32 %v648, %v684
    %v687 = vmax.f32 %v686, 0.0
    %v688 = vld [vmem:[%s27] sm:$0xff]
    %v689 = vld [vmem:[%s27 + $0x8] sm:$0xf]
    %vm690 = vcmask 97280
    %v692 = vsel %vm690, %v687, 0
    %vm694 = vcmask 1043456
    %v696 = vsel %vm694, %v689, 0
    %698 = vmatpush.msra.mxu0 0.0
    %699 = vmatpush.msra.mxu0 0.0
    %700 = vmatpush.msra.mxu0 0.0
    %701 = vmatpush.msra.mxu0 0.0
    %702 = vmatpush.msra.mxu0 0.0
    %703 = vmatpush.msra.mxu0 0.0
    %704 = vmatpush.msra.mxu0 0.0
    %705 = vmatpush.msra.mxu0 0.0
    %706 = vmatpush.msra.mxu0 0.0
    %707 = vmatpush.msra.mxu0 0.0
    %708 = vmatpush.msra.mxu0 0.0
    %709 = vmatpush.msra.mxu0 0.0
    %710 = vmatpush.msra.mxu0 0.0
    %711 = vmatpush.msra.mxu0 0.0
    %712 = vmatpush.msra.mxu0 %v696
    %713 = vmatpush.msra.mxu0 %v688
    %714 = vmatmul.f32.gmra.mxu0 %v692
    %v715 = vpop.f32.mrf.mxu0
    %v716 = vadd.f32 0.0, %v715
    %717 = vdwg.mxu0
    %v718 = vmul.f32 %v716, 2.0
    %v719 = vxor.u32 %v718, 2147483648
    %v720 = vmul.f32 %v719, 1.442695
    %v721 = vpow.pop %v720
    %v722 = vadd.f32 %v721, 1.0
    %v723 = vrcp.pop %v722
    %v724 = vmul.f32 %v722, %v723
    %v725 = vsub.f32 1.0, %v724
    %v726 = vmul.f32 %v723, %v725
    %v727 = vadd.f32 %v723, %v726
    %vm728 = vweird.f32 %v722
    %vm729 = vweird.f32 %v723
    %vm730 = vmor %vm728, %vm729
    %v731 = vsel %vm730, %v723, %v727
    %v732 = vand.u32 2147483647, %v722
    %vm733 = vcmp.eq.f32.partialorder %v732, 8.507059e+37
    %v734 = vand.u32 %v722, 2147483648
    %v735 = vor.u32 1.1754944e-38, %v734
    %v736 = vsel %vm733, %v735, %v731
    %v737 = vmul.f32 1.0, %v736
    %v738 = vmul.f32 %v284, %v737
    %v739 = vld [vmem:[%s29] sm:$0xff]
    %v740 = vld [vmem:[%s29 + $0x8] sm:$0xf]
    %v742 = vsel %vm694, %v740, 0
    %744 = vmatpush.msra.mxu0 0.0
    %745 = vmatpush.msra.mxu0 0.0
    %746 = vmatpush.msra.mxu0 0.0
    %747 = vmatpush.msra.mxu0 0.0
    %748 = vmatpush.msra.mxu0 0.0
    %749 = vmatpush.msra.mxu0 0.0
    %750 = vmatpush.msra.mxu0 0.0
    %751 = vmatpush.msra.mxu0 0.0
    %752 = vmatpush.msra.mxu0 0.0
    %753 = vmatpush.msra.mxu0 0.0
    %754 = vmatpush.msra.mxu0 0.0
    %755 = vmatpush.msra.mxu0 0.0
    %756 = vmatpush.msra.mxu0 0.0
    %757 = vmatpush.msra.mxu0 0.0
    %758 = vmatpush.msra.mxu0 %v742
    %759 = vmatpush.msra.mxu0 %v739
    %760 = vmatmul.f32.gmra.mxu0 %v692
    %v761 = vpop.f32.mrf.mxu0
    %v762 = vadd.f32 0.0, %v761
    %763 = vdwg.mxu0
    %v764 = vmul.f32 %v762, 2.0
    %v765 = vxor.u32 %v764, 2147483648
    %v766 = vmul.f32 %v765, 1.442695
    %v767 = vpow.pop %v766
    %v768 = vadd.f32 %v767, 1.0
    %v769 = vrcp.pop %v768
    %v770 = vmul.f32 %v768, %v769
    %v771 = vsub.f32 1.0, %v770
    %v772 = vmul.f32 %v769, %v771
    %v773 = vadd.f32 %v769, %v772
    %vm774 = vweird.f32 %v768
    %vm775 = vweird.f32 %v769
    %vm776 = vmor %vm774, %vm775
    %v777 = vsel %vm776, %v769, %v773
    %v778 = vand.u32 2147483647, %v768
    %vm779 = vcmp.eq.f32.partialorder %v778, 8.507059e+37
    %v780 = vand.u32 %v768, 2147483648
    %v781 = vor.u32 1.1754944e-38, %v780
    %v782 = vsel %vm779, %v781, %v777
    %v783 = vmul.f32 1.0, %v782
    %v784 = vmul.f32 %v285, %v783
    %v785 = vld [vmem:[%s31] sm:$0xff]
    %v786 = vld [vmem:[%s31 + $0x8] sm:$0xf]
    %v788 = vsel %vm694, %v786, 0
    %790 = vmatpush.msra.mxu0 0.0
    %791 = vmatpush.msra.mxu0 0.0
    %792 = vmatpush.msra.mxu0 0.0
    %793 = vmatpush.msra.mxu0 0.0
    %794 = vmatpush.msra.mxu0 0.0
    %795 = vmatpush.msra.mxu0 0.0
    %796 = vmatpush.msra.mxu0 0.0
    %797 = vmatpush.msra.mxu0 0.0
    %798 = vmatpush.msra.mxu0 0.0
    %799 = vmatpush.msra.mxu0 0.0
    %800 = vmatpush.msra.mxu0 0.0
    %801 = vmatpush.msra.mxu0 0.0
    %802 = vmatpush.msra.mxu0 0.0
    %803 = vmatpush.msra.mxu0 0.0
    %804 = vmatpush.msra.mxu0 %v788
    %805 = vmatpush.msra.mxu0 %v785
    %806 = vmatmul.f32.gmra.mxu0 %v692
    %v807 = vpop.f32.mrf.mxu0
    %v808 = vadd.f32 0.0, %v807
    %809 = vdwg.mxu0
    %v810 = vmul.f32 %v808, 2.0
    %v811 = vxor.u32 %v810, 2147483648
    %v812 = vmul.f32 %v811, 1.442695
    %v813 = vpow.pop %v812
    %v814 = vadd.f32 %v813, 1.0
    %v815 = vrcp.pop %v814
    %v816 = vmul.f32 %v814, %v815
    %v817 = vsub.f32 1.0, %v816
    %v818 = vmul.f32 %v815, %v817
    %v819 = vadd.f32 %v815, %v818
    %vm820 = vweird.f32 %v814
    %vm821 = vweird.f32 %v815
    %vm822 = vmor %vm820, %vm821
    %v823 = vsel %vm822, %v815, %v819
    %v824 = vand.u32 2147483647, %v814
    %vm825 = vcmp.eq.f32.partialorder %v824, 8.507059e+37
    %v826 = vand.u32 %v814, 2147483648
    %v827 = vor.u32 1.1754944e-38, %v826
    %v828 = vsel %vm825, %v827, %v823
    %v829 = vmul.f32 1.0, %v828
    %v830 = vmul.f32 %v595, %v829
    %vm831 = vcmask 254976
    %v832 = vsel %vm831, %v738, -inf
    %833 = vmax.xlane.f32.xlu0 %v832
    %v834 = vpop.xlane.xlu0 %833
    %v835 = vsel %vm831, %v784, -inf
    %836 = vmax.xlane.f32.xlu0 %v835
    %v837 = vpop.xlane.xlu0 %836
    %v838 = vmax.f32 %v834, %v837
    %vm839 = vcmask 1041408
    %v840 = vsel %vm839, %v830, -inf
    %841 = vmax.xlane.f32.xlu0 %v840
    %v842 = vpop.xlane.xlu0 %841
    %v843 = vmax.f32 %v838, %v842
    %v844 = vsel %vm831, %v738, 0.0
    %845 = vadd.xlane.f32.xlu0 %v844
    %v846 = vpop.xlane.xlu0 %845
    %v847 = vsel %vm831, %v784, 0.0
    %848 = vadd.xlane.f32.xlu0 %v847
    %v849 = vpop.xlane.xlu0 %848
    %v850 = vadd.f32 %v846, %v849
    %v851 = vsel %vm839, %v830, 0.0
    %852 = vadd.xlane.f32.xlu0 %v851
    %v853 = vpop.xlane.xlu0 %852
    %v854 = vadd.f32 %v850, %v853
    %v855 = vmul.f32 %v854, 0.0052083335
    %v856 = vld [vmem:[%s33] sm:$0x1]
    %v858 = vperm.slane %v856, 0
    %v860 = vmul.f32 %v843, %v858
    %v861 = vmul.f32 %v855, %v858
    %863 = vrot.lane.b32.xlu0 %v861, 127
    %v864 = vpop.permute.xlu0 %863
    %v866 = vadd.f32 %v860, %v864
    %v867 = vld [vmem:[#allocation2] sm:$0x1]
    %v869 = vperm.slane %v867, 0
    %v871 = vadd.f32 %v866, %v869
    %v872 = vxor.u32 %v871, 2147483648
    %v873 = vmul.f32 %v872, 1.442695
    %v874 = vpow.pop %v873
    %v875 = vadd.f32 %v874, 1.0
    %v876 = vrcp.pop %v875
    %v877 = vmul.f32 %v875, %v876
    %v878 = vsub.f32 1.0, %v877
    %v879 = vmul.f32 %v876, %v878
    %v880 = vadd.f32 %v876, %v879
    %vm881 = vweird.f32 %v875
    %vm882 = vweird.f32 %v876
    %vm883 = vmor %vm881, %vm882
    %v884 = vsel %vm883, %v876, %v880
    %v885 = vand.u32 2147483647, %v875
    %vm886 = vcmp.eq.f32.partialorder %v885, 8.507059e+37
    %v887 = vand.u32 %v875, 2147483648
    %v888 = vor.u32 1.1754944e-38, %v887
    %v889 = vsel %vm886, %v888, %v884
    %v890 = vmul.f32 1.0, %v889
    %892 = vset.pattern.permute.xlu0 0
    %893 = vperm.xlu0 %892, %v890
    %v894 = vpop.permute.xlu0 %893
    %v896 = vmul.f32 %v738, %v894
    %v897 = vadd.f32 %v896, %v284
    %v898 = vmul.f32 %v784, %v894
    %v899 = vadd.f32 %v898, %v285
    %v900 = vmul.f32 %v830, %v894
    %v901 = vadd.f32 %v900, %v595
    %v902 = vld [vmem:[%s37] sm:$0xff]
    %v903 = vld [vmem:[%s37 + $0x8] sm:$0xff]
    %v904 = vld [vmem:[%s37 + $0x10] sm:$0xff]
    %v905 = vld [vmem:[%s37 + $0x18] sm:$0xff]
    %v906 = vld [vmem:[%s39] sm:$0xff]
    %v907 = vld [vmem:[%s39 + $0x8] sm:$0xff]
    %v908 = vld [vmem:[%s39 + $0x10] sm:$0xff]
    %v909 = vld [vmem:[%s39 + $0x18] sm:$0xff]
    %v911 = vsel %vm342, %v899, 0
    %913 = vmatpush.msra.mxu0 0.0
    %914 = vmatpush.msra.mxu0 0.0
    %915 = vmatpush.msra.mxu0 0.0
    %916 = vmatpush.msra.mxu0 0.0
    %917 = vmatpush.msra.mxu0 0.0
    %918 = vmatpush.msra.mxu0 0.0
    %919 = vmatpush.msra.mxu0 0.0
    %920 = vmatpush.msra.mxu0 0.0
    %921 = vmatpush.msra.mxu0 0.0
    %922 = vmatpush.msra.mxu0 0.0
    %923 = vmatpush.msra.mxu0 0.0
    %924 = vmatpush.msra.mxu0 0.0
    %925 = vmatpush.msra.mxu0 %v909
    %926 = vmatpush.msra.mxu0 %v908
    %927 = vmatpush.msra.mxu0 %v907
    %928 = vmatpush.msra.mxu0 %v906
    %929 = vmatmul.f32.gmra.mxu0 %v911
    %v930 = vpop.f32.mrf.mxu0
    %v931 = vadd.f32 0.0, %v930
    %932 = vdwg.mxu0
    %v934 = vsel %vm342, %v897, 0
    %936 = vmatpush.msra.mxu0 0.0
    %937 = vmatpush.msra.mxu0 0.0
    %938 = vmatpush.msra.mxu0 0.0
    %939 = vmatpush.msra.mxu0 0.0
    %940 = vmatpush.msra.mxu0 0.0
    %941 = vmatpush.msra.mxu0 0.0
    %942 = vmatpush.msra.mxu0 0.0
    %943 = vmatpush.msra.mxu0 0.0
    %944 = vmatpush.msra.mxu0 0.0
    %945 = vmatpush.msra.mxu0 0.0
    %946 = vmatpush.msra.mxu0 0.0
    %947 = vmatpush.msra.mxu0 0.0
    %948 = vmatpush.msra.mxu0 %v905
    %949 = vmatpush.msra.mxu0 %v904
    %950 = vmatpush.msra.mxu0 %v903
    %951 = vmatpush.msra.mxu0 %v902
    %952 = vmatmul.f32.gmra.mxu0 %v934
    %v953 = vpop.f32.mrf.mxu0
    %v954 = vadd.f32 %v931, %v953
    %955 = vdwg.mxu0
    %v956 = vld [vmem:[%s41] sm:$0xff]
    %v957 = vld [vmem:[%s41 + $0x8] sm:$0xff]
    %v958 = vld [vmem:[%s41 + $0x10] sm:$0xff]
    %v959 = vld [vmem:[%s41 + $0x18] sm:$0xff]
    %v960 = vld [vmem:[%s41 + $0x20] sm:$0xff]
    %v961 = vld [vmem:[%s41 + $0x28] sm:$0xff]
    %v962 = vld [vmem:[%s41 + $0x30] sm:$0xff]
    %v963 = vld [vmem:[%s41 + $0x38] sm:$0xff]
    %v964 = vld [vmem:[%s41 + $0x40] sm:$0xff]
    %v965 = vld [vmem:[%s41 + $0x48] sm:$0xff]
    %v966 = vld [vmem:[%s41 + $0x50] sm:$0xff]
    %v967 = vld [vmem:[%s41 + $0x58] sm:$0xff]
    %v968 = vld [vmem:[%s41 + $0x60] sm:$0xff]
    %v969 = vld [vmem:[%s41 + $0x68] sm:$0xff]
    %v970 = vld [vmem:[%s41 + $0x70] sm:$0xff]
    %v971 = vld [vmem:[%s41 + $0x78] sm:$0xff]
    %972 = vmatpush.msra.mxu0 %v971
    %973 = vmatpush.msra.mxu0 %v970
    %974 = vmatpush.msra.mxu0 %v969
    %975 = vmatpush.msra.mxu0 %v968
    %976 = vmatpush.msra.mxu0 %v967
    %977 = vmatpush.msra.mxu0 %v966
    %978 = vmatpush.msra.mxu0 %v965
    %979 = vmatpush.msra.mxu0 %v964
    %980 = vmatpush.msra.mxu0 %v963
    %981 = vmatpush.msra.mxu0 %v962
    %982 = vmatpush.msra.mxu0 %v961
    %983 = vmatpush.msra.mxu0 %v960
    %984 = vmatpush.msra.mxu0 %v959
    %985 = vmatpush.msra.mxu0 %v958
    %986 = vmatpush.msra.mxu0 %v957
    %987 = vmatpush.msra.mxu0 %v956
    %988 = vmatmul.f32.gmra.mxu0 %v901
    %v989 = vpop.f32.mrf.mxu0
    %v990 = vadd.f32 0.0, %v989
    %991 = vdwg.mxu0
    %v992 = vadd.f32 %v954, %v990
    %v993 = vld [vmem:[%s43] sm:$0x1]
    %v995 = vperm.slane %v993, 0
    %v997 = vadd.f32 %v992, %v995
    %v998 = vld [vmem:[%s45] sm:$0xff]
    %v999 = vld [vmem:[%s45 + $0x8] sm:$0xff]
    %v1000 = vld [vmem:[%s45 + $0x10] sm:$0xff]
    %v1001 = vld [vmem:[%s45 + $0x18] sm:$0xff]
    %v1002 = vld [vmem:[%s45 + $0x20] sm:$0xff]
    %v1003 = vld [vmem:[%s45 + $0x28] sm:$0xff]
    %v1004 = vld [vmem:[%s45 + $0x30] sm:$0xff]
    %v1005 = vld [vmem:[%s45 + $0x38] sm:$0xff]
    %v1006 = vld [vmem:[%s47] sm:$0x1]
    %v1008 = vperm.slane %v1006, 0
    %vm1010 = vcmask 523264
    %v1012 = vsel %vm1010, %v997, 0
    %1014 = vmatpush.msra.mxu0 0.0
    %1015 = vmatpush.msra.mxu0 0.0
    %1016 = vmatpush.msra.mxu0 0.0
    %1017 = vmatpush.msra.mxu0 0.0
    %1018 = vmatpush.msra.mxu0 0.0
    %1019 = vmatpush.msra.mxu0 0.0
    %1020 = vmatpush.msra.mxu0 0.0
    %1021 = vmatpush.msra.mxu0 0.0
    %1022 = vmatpush.msra.mxu0 %v1005
    %1023 = vmatpush.msra.mxu0 %v1004
    %1024 = vmatpush.msra.mxu0 %v1003
    %1025 = vmatpush.msra.mxu0 %v1002
    %1026 = vmatpush.msra.mxu0 %v1001
    %1027 = vmatpush.msra.mxu0 %v1000
    %1028 = vmatpush.msra.mxu0 %v999
    %1029 = vmatpush.msra.mxu0 %v998
    %1030 = vmatmul.f32.gmra.mxu0 %v1012
    %v1031 = vpop.f32.mrf.mxu0
    %v1032 = vadd.f32 %v1008, %v1031
    %1033 = vdwg.mxu0
    %v1034 = vmax.f32 %v1032, 0.0
    %v1035 = vld [vmem:[%s49] sm:$0xff]
    %v1036 = vld [vmem:[%s49 + $0x8] sm:$0xff]
    %v1037 = vld [vmem:[%s49 + $0x10] sm:$0xff]
    %v1038 = vld [vmem:[%s49 + $0x18] sm:$0xff]
    %v1039 = vld [vmem:[%s51] sm:$0xff]
    %v1040 = vld [vmem:[%s51 + $0x8] sm:$0xff]
    %v1041 = vld [vmem:[%s51 + $0x10] sm:$0xff]
    %v1042 = vld [vmem:[%s51 + $0x18] sm:$0xff]
    %1043 = vmatpush.msra.mxu0 0.0
    %1044 = vmatpush.msra.mxu0 0.0
    %1045 = vmatpush.msra.mxu0 0.0
    %1046 = vmatpush.msra.mxu0 0.0
    %1047 = vmatpush.msra.mxu0 0.0
    %1048 = vmatpush.msra.mxu0 0.0
    %1049 = vmatpush.msra.mxu0 0.0
    %1050 = vmatpush.msra.mxu0 0.0
    %1051 = vmatpush.msra.mxu0 0.0
    %1052 = vmatpush.msra.mxu0 0.0
    %1053 = vmatpush.msra.mxu0 0.0
    %1054 = vmatpush.msra.mxu0 0.0
    %1055 = vmatpush.msra.mxu0 %v1042
    %1056 = vmatpush.msra.mxu0 %v1041
    %1057 = vmatpush.msra.mxu0 %v1040
    %1058 = vmatpush.msra.mxu0 %v1039
    %1059 = vmatmul.f32.gmra.mxu0 %v911
    %v1060 = vpop.f32.mrf.mxu0
    %v1061 = vadd.f32 0.0, %v1060
    %1062 = vdwg.mxu0
    %1063 = vmatpush.msra.mxu0 0.0
    %1064 = vmatpush.msra.mxu0 0.0
    %1065 = vmatpush.msra.mxu0 0.0
    %1066 = vmatpush.msra.mxu0 0.0
    %1067 = vmatpush.msra.mxu0 0.0
    %1068 = vmatpush.msra.mxu0 0.0
    %1069 = vmatpush.msra.mxu0 0.0
    %1070 = vmatpush.msra.mxu0 0.0
    %1071 = vmatpush.msra.mxu0 0.0
    %1072 = vmatpush.msra.mxu0 0.0
    %1073 = vmatpush.msra.mxu0 0.0
    %1074 = vmatpush.msra.mxu0 0.0
    %1075 = vmatpush.msra.mxu0 %v1038
    %1076 = vmatpush.msra.mxu0 %v1037
    %1077 = vmatpush.msra.mxu0 %v1036
    %1078 = vmatpush.msra.mxu0 %v1035
    %1079 = vmatmul.f32.gmra.mxu0 %v934
    %v1080 = vpop.f32.mrf.mxu0
    %v1081 = vadd.f32 %v1061, %v1080
    %1082 = vdwg.mxu0
    %v1083 = vld [vmem:[%s53] sm:$0xff]
    %v1084 = vld [vmem:[%s53 + $0x8] sm:$0xff]
    %v1085 = vld [vmem:[%s53 + $0x10] sm:$0xff]
    %v1086 = vld [vmem:[%s53 + $0x18] sm:$0xff]
    %v1087 = vld [vmem:[%s53 + $0x20] sm:$0xff]
    %v1088 = vld [vmem:[%s53 + $0x28] sm:$0xff]
    %v1089 = vld [vmem:[%s53 + $0x30] sm:$0xff]
    %v1090 = vld [vmem:[%s53 + $0x38] sm:$0xff]
    %v1091 = vld [vmem:[%s53 + $0x40] sm:$0xff]
    %v1092 = vld [vmem:[%s53 + $0x48] sm:$0xff]
    %v1093 = vld [vmem:[%s53 + $0x50] sm:$0xff]
    %v1094 = vld [vmem:[%s53 + $0x58] sm:$0xff]
    %v1095 = vld [vmem:[%s53 + $0x60] sm:$0xff]
    %v1096 = vld [vmem:[%s53 + $0x68] sm:$0xff]
    %v1097 = vld [vmem:[%s53 + $0x70] sm:$0xff]
    %v1098 = vld [vmem:[%s53 + $0x78] sm:$0xff]
    %1099 = vmatpush.msra.mxu0 %v1098
    %1100 = vmatpush.msra.mxu0 %v1097
    %1101 = vmatpush.msra.mxu0 %v1096
    %1102 = vmatpush.msra.mxu0 %v1095
    %1103 = vmatpush.msra.mxu0 %v1094
    %1104 = vmatpush.msra.mxu0 %v1093
    %1105 = vmatpush.msra.mxu0 %v1092
    %1106 = vmatpush.msra.mxu0 %v1091
    %1107 = vmatpush.msra.mxu0 %v1090
    %1108 = vmatpush.msra.mxu0 %v1089
    %1109 = vmatpush.msra.mxu0 %v1088
    %1110 = vmatpush.msra.mxu0 %v1087
    %1111 = vmatpush.msra.mxu0 %v1086
    %1112 = vmatpush.msra.mxu0 %v1085
    %1113 = vmatpush.msra.mxu0 %v1084
    %1114 = vmatpush.msra.mxu0 %v1083
    %1115 = vmatmul.f32.gmra.mxu0 %v901
    %v1116 = vpop.f32.mrf.mxu0
    %v1117 = vadd.f32 0.0, %v1116
    %1118 = vdwg.mxu0
    %v1119 = vadd.f32 %v1081, %v1117
    %v1120 = vld [vmem:[%s55] sm:$0xff]
    %v1121 = vld [vmem:[%s55 + $0x8] sm:$0xff]
    %v1122 = vld [vmem:[%s55 + $0x10] sm:$0xff]
    %v1123 = vld [vmem:[%s55 + $0x18] sm:$0xff]
    %v1124 = vld [vmem:[%s55 + $0x20] sm:$0xff]
    %v1125 = vld [vmem:[%s55 + $0x28] sm:$0xff]
    %v1126 = vld [vmem:[%s55 + $0x30] sm:$0xff]
    %v1127 = vld [vmem:[%s55 + $0x38] sm:$0xff]
    %v1128 = vld [vmem:[%s55 + $0x40] sm:$0xff]
    %v1129 = vld [vmem:[%s55 + $0x48] sm:$0xff]
    %v1130 = vld [vmem:[%s55 + $0x50] sm:$0xff]
    %v1131 = vld [vmem:[%s55 + $0x58] sm:$0xff]
    %v1132 = vld [vmem:[%s55 + $0x60] sm:$0xff]
    %v1133 = vld [vmem:[%s55 + $0x68] sm:$0xff]
    %v1134 = vld [vmem:[%s55 + $0x70] sm:$0xff]
    %v1135 = vld [vmem:[%s55 + $0x78] sm:$0xff]
    %1136 = vmatpush.msra.mxu0 %v1135
    %1137 = vmatpush.msra.mxu0 %v1134
    %1138 = vmatpush.msra.mxu0 %v1133
    %1139 = vmatpush.msra.mxu0 %v1132
    %1140 = vmatpush.msra.mxu0 %v1131
    %1141 = vmatpush.msra.mxu0 %v1130
    %1142 = vmatpush.msra.mxu0 %v1129
    %1143 = vmatpush.msra.mxu0 %v1128
    %1144 = vmatpush.msra.mxu0 %v1127
    %1145 = vmatpush.msra.mxu0 %v1126
    %1146 = vmatpush.msra.mxu0 %v1125
    %1147 = vmatpush.msra.mxu0 %v1124
    %1148 = vmatpush.msra.mxu0 %v1123
    %1149 = vmatpush.msra.mxu0 %v1122
    %1150 = vmatpush.msra.mxu0 %v1121
    %1151 = vmatpush.msra.mxu0 %v1120
    %1152 = vmatmul.f32.gmra.mxu0 %v1034
    %v1153 = vpop.f32.mrf.mxu0
    %v1154 = vadd.f32 0.0, %v1153
    %1155 = vdwg.mxu0
    %v1156 = vadd.f32 %v1119, %v1154
    %v1157 = vld [vmem:[%s57] sm:$0x1]
    %v1159 = vperm.slane %v1157, 0
    %v1161 = vadd.f32 %v1156, %v1159
    %1162 = vst [vmem:[#allocation3] sm:$0x3] %v1161
    // Predicated region
    $region118: #{esamble_forward.1} parent=1 // pred_check
      _
    $region119: #{esamble_forward.1} parent=1 // pred_check_branch
      %1164 = sbr.rel (0) target = $region121
    $region120: #{esamble_forward.1} parent=1 // pred_region
      %1166 = vsyncadd [#allocation4], 0
      %s1168 = sshll.u32 [#allocation3], 4
      %s1169 = int_to_ptr.vmem [resolvable:$true] %s1168
      %s1170 = sshll.u32 %s59, 4
      %s1171 = int_to_ptr.hbm [resolvable:$true] %s1170
      %1173 = dma.vmem_to_hbm [thread:$0]  %s1169, 32, %s1171, [#allocation4]
    $region121: #{esamble_forward.1} parent=1 // pred_fallthru
      _
    // Predicated region
    $region122: #{esamble_forward.1} parent=1 // pred_check
      _
    $region123: #{esamble_forward.1} parent=1 // pred_check_branch
      %1175 = sbr.rel (0) target = $region125
    $region124: #{esamble_forward.1} parent=1 // pred_region
      %1177 = dma.done [#allocation4], 32
    $region125: #{esamble_forward.1} parent=1 // pred_fallthru
      _
    %1178 = vsyncpa [#allocation4], 1

</llo_original>
